<compile_context>
chip_gen: v7x
topology: tpu7x:2x2x1
jax: 0.10.0
libtpu: 0.0.40
codegen_flags: <defaults>
</compile_context>

<pallas_src>
import jax
import jax.numpy as jnp
from jax import lax
from jax.experimental import pallas as pl
from jax.experimental.pallas import tpu as pltpu

BN_EPS = 1e-5
LANE = 128


def _round_up(x: int, m: int) -> int:
    return (x + m - 1) // m * m


def determine_padding(kernel_size: int, padding: bool, stride: int, dilation: int):
    if padding:
        total_pad = dilation * (kernel_size - 1) + 1 - stride
        return (total_pad // 2 + total_pad % 2, total_pad // 2)
    return (0, 0)


def _make_conv_stats_kernel(K: int, Wp: int, L: int):
    """Conv (K*K shifted MXU matmuls, f32 acc) + global per-channel sum/sumsq."""

    def kernel(x_ref, w_ref, mask_ref, conv_ref, sum_ref, sq_ref):
        n = pl.program_id(0)

        @pl.when(n == 0)
        def _():
            sum_ref[...] = jnp.zeros_like(sum_ref)
            sq_ref[...] = jnp.zeros_like(sq_ref)

        cout_pad = w_ref.shape[1]
        acc = jnp.zeros((cout_pad, L), jnp.float32)
        # K*K shifted matmuls; static unrolled loop, static slab offsets.
        # Each slab is a contiguous flat window of the image: output position
        # p = h*Wp + w needs input position p + kh*Wp + kw for tap (kh, kw).
        for kh in range(K):
            for kw in range(K):
                off = kh * Wp + kw
                slab = x_ref[0, :, off:off + L].astype(jnp.bfloat16)   # (Cin, L)
                acc = acc + jnp.dot(
                    w_ref[kh * K + kw], slab,
                    preferred_element_type=jnp.float32)                # (Cout_pad, L)

        # Zero the W-wraparound junk columns (positions with w >= Wout) so the
        # BatchNorm statistics only see valid conv outputs.
        masked = acc * mask_ref[...]                                    # (1, L) bcast
        conv_ref[0] = masked.astype(jnp.bfloat16)
        # Resident accumulators across the batch grid axis ("arbitrary").
        sum_ref[...] += jnp.sum(masked, axis=1, keepdims=True)
        sq_ref[...] += jnp.sum(masked * masked, axis=1, keepdims=True)

    return kernel


def convolutional_block_forward(
    x_nchw,          # (N, Cin, H, W)  f32
    w_oihw,          # (Cout, Cin, K, K)
    bias,            # (Cout,)  conv bias -- cancelled exactly by train-mode BN
    gamma,           # (Cout,)  BatchNorm weight
    beta,            # (Cout,)  BatchNorm bias
    *,
    kernel_size: int = 3,
    padding: bool = False,
    stride: int = 1,
    dilation: int = 1,
):
    assert dilation == 1, "Dilation not supported (matches the module assert)"
    if stride != 1:
        # TODO(synk): strided conv needs strided slab reads (pl.ds stride) +
        # extra flat padding; only the module-default stride=1 is implemented.
        raise NotImplementedError("stride != 1 not implemented in the Pallas path")
    del bias  # exactly cancelled by BatchNorm mean subtraction (training mode)

    N, Cin, H, W = x_nchw.shape
    Cout = w_oihw.shape[0]
    K = kernel_size

    pad_lo, pad_hi = determine_padding(K, padding, stride, dilation)
    if pad_lo or pad_hi:
        x_nchw = jnp.pad(
            x_nchw, ((0, 0), (0, 0), (pad_lo, pad_hi), (pad_lo, pad_hi)))
    Hp, Wp = H + pad_lo + pad_hi, W + pad_lo + pad_hi
    Hout = Hp - K + 1
    Wout = Wp - K + 1
    HW = Hp * Wp
    # Flat output positions per image (valid positions + W-wraparound junk).
    L = (Hout - 1) * Wp + Wout          # note: max slab offset + L == HW exactly

    # Free metadata reshape; x stays f32 in HBM and is cast to bf16 in-kernel
    # (cheaper than an XLA pre-cast pass: one 4B read vs 4B read + 2B wr + 2B rd).
    x_flat = x_nchw.reshape(N, Cin, HW)

    cout_pad = _round_up(Cout, LANE)
    # weights: (Cout, Cin, KH, KW) -> (K*K, Cout_pad, Cin), bf16, resident block
    w = jnp.transpose(w_oihw, (2, 3, 0, 1)).reshape(K * K, Cout, Cin)
    w = jnp.pad(w, ((0, 0), (0, cout_pad - Cout), (0, 0))).astype(jnp.bfloat16)

    # 0/1 validity mask over flat positions: junk where (pos % Wp) >= Wout.
    pos = jnp.arange(L, dtype=jnp.int32)
    mask = ((pos % Wp) < Wout).astype(jnp.float32).reshape(1, L)

    kernel = _make_conv_stats_kernel(K, Wp, L)

    flops = 2 * N * K * K * cout_pad * Cin * L
    bytes_accessed = (N * Cin * HW * 4 + K * K * cout_pad * Cin * 2 + L * 4
                      + N * cout_pad * L * 2 + 2 * cout_pad * 4)
    # Double-buffered x + conv blocks, resident weight + mask, plus margin.
    vmem_need = (2 * Cin * HW * 4 + 2 * cout_pad * L * 2
                 + K * K * cout_pad * Cin * 2 + 2 * L * 4 + (2 << 20))
    vmem_limit = int(min(max(vmem_need, 32 * 1024 * 1024), 64 * 1024 * 1024))

    conv_out, ch_sum, ch_sumsq = pl.pallas_call(
        kernel,
        out_shape=(
            jax.ShapeDtypeStruct((N, cout_pad, L), jnp.bfloat16),
            jax.ShapeDtypeStruct((cout_pad, 1), jnp.float32),
            jax.ShapeDtypeStruct((cout_pad, 1), jnp.float32),
        ),
        grid=(N,),
        in_specs=[
            pl.BlockSpec((1, Cin, HW), lambda n: (n, 0, 0)),        # one image
            pl.BlockSpec((K * K, cout_pad, Cin), lambda n: (0, 0, 0)),  # weights
            pl.BlockSpec((1, L), lambda n: (0, 0)),                 # validity mask
        ],
        out_specs=(
            pl.BlockSpec((1, cout_pad, L), lambda n: (n, 0, 0)),
            pl.BlockSpec((cout_pad, 1), lambda n: (0, 0)),
            pl.BlockSpec((cout_pad, 1), lambda n: (0, 0)),
        ),
        compiler_params=pltpu.CompilerParams(
            dimension_semantics=("arbitrary",),   # stats accumulate across images
            vmem_limit_bytes=vmem_limit,
        ),
        cost_estimate=pl.CostEstimate(
            flops=flops, transcendentals=0, bytes_accessed=bytes_accessed),
    )(x_flat, w, mask)

    # --- BN fold + ReLU + layout finalize: ONE fused XLA pass over bf16 conv ---
    m_valid = jnp.float32(N * Hout * Wout)  # masked junk contributed exactly 0
    mean = ch_sum[:Cout, 0] / m_valid
    var = jnp.maximum(ch_sumsq[:Cout, 0] / m_valid - mean * mean, 0.0)
    scale = gamma.astype(jnp.float32) * lax.rsqrt(var + BN_EPS)
    shift = beta.astype(jnp.float32) - mean * scale

    y = conv_out[:, :Cout, :].astype(jnp.float32)
    y = y * scale[None, :, None] + shift[None, :, None]
    y = jnp.maximum(y, 0.0)
    # flat (channel-major) -> NCHW: pad the flat axis to Hout*Wp, split, drop junk cols
    y = jnp.pad(y, ((0, 0), (0, 0), (0, Hout * Wp - L)))
    y = y.reshape(N, Cout, Hout, Wp)[:, :, :, :Wout]
    return y


def _reference_forward(x_nchw, w_oihw, bias, gamma, beta):
    """Pure-JAX reference: Conv2d(valid, bf16 operands / f32 acc) -> BN(train) -> ReLU."""
    y = lax.conv_general_dilated(
        x_nchw.astype(jnp.bfloat16),
        w_oihw.astype(jnp.bfloat16),
        window_strides=(1, 1),
        padding="VALID",
        dimension_numbers=("NCHW", "OIHW", "NCHW"),
        preferred_element_type=jnp.float32,
    ) + bias.reshape(1, -1, 1, 1)
    mean = jnp.mean(y, axis=(0, 2, 3), keepdims=True)
    var = jnp.mean((y - mean) ** 2, axis=(0, 2, 3), keepdims=True)
    y = (y - mean) * lax.rsqrt(var + BN_EPS)
    y = y * gamma.reshape(1, -1, 1, 1) + beta.reshape(1, -1, 1, 1)
    return jnp.maximum(y, 0.0)


if __name__ == "__main__":
    key = jax.random.PRNGKey(0)
    k_x, k_w, k_b, k_g, k_bt = jax.random.split(key, 5)

    N, Cin, H, W = 2, 4, 16, 16
    Cout, K = 8, 3

    x = jax.random.normal(k_x, (N, Cin, H, W), dtype=jnp.float32)

    # Deterministic Conv2d-style init: U(-bound, bound), bound = 1/sqrt(fan_in)
    fan_in = Cin * K * K
    bound = 1.0 / (fan_in ** 0.5)
    w = jax.random.uniform(k_w, (Cout, Cin, K, K), jnp.float32, -bound, bound)
    b = jax.random.uniform(k_b, (Cout,), jnp.float32, -bound, bound)
    # Non-trivial BatchNorm affine params (as after training) to exercise the fold.
    gamma = 1.0 + 0.1 * jax.random.normal(k_g, (Cout,), jnp.float32)
    beta = 0.05 * jax.random.normal(k_bt, (Cout,), jnp.float32)

    fwd = jax.jit(convolutional_block_forward)
    out = jax.block_until_ready(fwd(x, w, b, gamma, beta))

    ref = jax.block_until_ready(_reference_forward(x, w, b, gamma, beta))
    assert out.shape == (N, Cout, H - K + 1, W - K + 1), out.shape
    # Tolerance covers bf16 storage of the conv intermediate (stats are f32-exact).
    assert jnp.allclose(out, ref, atol=2e-2, rtol=2e-2), float(
        jnp.max(jnp.abs(out - ref))
    )
    print("KERNEL_OK")
</pallas_src>

<mosaic_0001>
module attributes {stable_mosaic.version = 11 : i64} {
  func.func @kernel(%arg0: i32, %arg1: memref<1x4x256xf32, #tpu.memory_space<vmem>>, %arg2: memref<9x128x4xbf16, #tpu.memory_space<vmem>>, %arg3: memref<1x222xf32, #tpu.memory_space<vmem>>, %arg4: memref<1x128x222xbf16, #tpu.memory_space<vmem>>, %arg5: memref<128x1xf32, #tpu.memory_space<vmem>>, %arg6: memref<128x1xf32, #tpu.memory_space<vmem>>) attributes {dimension_semantics = [#tpu.dimension_semantics<arbitrary>], iteration_bounds = array<i64: 2>, scalar_prefetch = 0 : i64, scratch_operands = 0 : i64, tpu.core_type = #tpu.core_type<tc>, window_params = [{transform_indices = @transform_0, window_bounds = array<i64: 1, 4, 256>}, {pipeline_mode = #tpu.pipeline_mode<synchronous>, transform_indices = @transform_1, window_bounds = array<i64: 9, 128, 4>}, {pipeline_mode = #tpu.pipeline_mode<synchronous>, transform_indices = @transform_2, window_bounds = array<i64: 1, 222>}, {transform_indices = @transform_3, window_bounds = array<i64: 1, 128, 222>}, {pipeline_mode = #tpu.pipeline_mode<synchronous>, transform_indices = @transform_4, window_bounds = array<i64: 128, 1>}, {pipeline_mode = #tpu.pipeline_mode<synchronous>, transform_indices = @transform_5, window_bounds = array<i64: 128, 1>}]} {
    %c0_i32 = arith.constant 0 : i32
    %0 = arith.cmpi eq, %arg0, %c0_i32 : i32
    %1 = arith.extui %0 : i1 to i32
    %c0_i32_0 = arith.constant 0 : i32
    %2 = arith.cmpi ne, %1, %c0_i32_0 : i32
    scf.if %2 {
      %cst_64 = arith.constant 0.000000e+00 : f32
      %85 = vector.broadcast %cst_64 : f32 to vector<128x1xf32>
      %c0_65 = arith.constant 0 : index
      %c0_66 = arith.constant 0 : index
      %86 = vector.load %arg5[%c0_65, %c0_66] : memref<128x1xf32, #tpu.memory_space<vmem>>, vector<128x1xf32>
      tpu.vector_store %arg5[%c0_65, %c0_66], %85 {strides = array<i32>} : memref<128x1xf32, #tpu.memory_space<vmem>>, vector<128x1xf32>,
      %cst_67 = arith.constant 0.000000e+00 : f32
      %87 = vector.broadcast %cst_67 : f32 to vector<128x1xf32>
      %c0_68 = arith.constant 0 : index
      %c0_69 = arith.constant 0 : index
      %88 = vector.load %arg6[%c0_68, %c0_69] : memref<128x1xf32, #tpu.memory_space<vmem>>, vector<128x1xf32>
      tpu.vector_store %arg6[%c0_68, %c0_69], %87 {strides = array<i32>} : memref<128x1xf32, #tpu.memory_space<vmem>>, vector<128x1xf32>,
    } else {
    }
    %cst = arith.constant 0.000000e+00 : f32
    %3 = vector.broadcast %cst : f32 to vector<128x222xf32>
    %c0 = arith.constant 0 : index
    %c0_1 = arith.constant 0 : index
    %c0_2 = arith.constant 0 : index
    %4 = vector.load %arg1[%c0, %c0_1, %c0_2] : memref<1x4x256xf32, #tpu.memory_space<vmem>>, vector<1x4x222xf32>
    %5 = vector.shape_cast %4 : vector<1x4x222xf32> to vector<4x222xf32>
    %6 = arith.truncf %5 : vector<4x222xf32> to vector<4x222xbf16>
    %c0_3 = arith.constant 0 : index
    %c0_4 = arith.constant 0 : index
    %c0_5 = arith.constant 0 : index
    %7 = vector.load %arg2[%c0_3, %c0_4, %c0_5] : memref<9x128x4xbf16, #tpu.memory_space<vmem>>, vector<1x128x4xbf16>
    %8 = vector.shape_cast %7 : vector<1x128x4xbf16> to vector<128x4xbf16>
    %cst_6 = arith.constant dense<0.000000e+00> : vector<128x222xf32>
    %9 = tpu.matmul %8, %6, %cst_6 {dimension_numbers = #tpu.dot_dimension_numbers<[1], [0], [0], [1], [0, 0, 1, 1], [], []>} : vector<128x4xbf16>, vector<4x222xbf16>, vector<128x222xf32> -> vector<128x222xf32>
    %10 = arith.addf %3, %9 : vector<128x222xf32>
    %c0_7 = arith.constant 0 : index
    %c0_8 = arith.constant 0 : index
    %c1 = arith.constant 1 : index
    %11 = vector.load %arg1[%c0_7, %c0_8, %c1] : memref<1x4x256xf32, #tpu.memory_space<vmem>>, vector<1x4x222xf32>
    %12 = vector.shape_cast %11 : vector<1x4x222xf32> to vector<4x222xf32>
    %13 = arith.truncf %12 : vector<4x222xf32> to vector<4x222xbf16>
    %c1_9 = arith.constant 1 : index
    %c0_10 = arith.constant 0 : index
    %c0_11 = arith.constant 0 : index
    %14 = vector.load %arg2[%c1_9, %c0_10, %c0_11] : memref<9x128x4xbf16, #tpu.memory_space<vmem>>, vector<1x128x4xbf16>
    %15 = vector.shape_cast %14 : vector<1x128x4xbf16> to vector<128x4xbf16>
    %cst_12 = arith.constant dense<0.000000e+00> : vector<128x222xf32>
    %16 = tpu.matmul %15, %13, %cst_12 {dimension_numbers = #tpu.dot_dimension_numbers<[1], [0], [0], [1], [0, 0, 1, 1], [], []>} : vector<128x4xbf16>, vector<4x222xbf16>, vector<128x222xf32> -> vector<128x222xf32>
    %17 = arith.addf %10, %16 : vector<128x222xf32>
    %c0_13 = arith.constant 0 : index
    %c0_14 = arith.constant 0 : index
    %c2 = arith.constant 2 : index
    %18 = vector.load %arg1[%c0_13, %c0_14, %c2] : memref<1x4x256xf32, #tpu.memory_space<vmem>>, vector<1x4x222xf32>
    %19 = vector.shape_cast %18 : vector<1x4x222xf32> to vector<4x222xf32>
    %20 = arith.truncf %19 : vector<4x222xf32> to vector<4x222xbf16>
    %c2_15 = arith.constant 2 : index
    %c0_16 = arith.constant 0 : index
    %c0_17 = arith.constant 0 : index
    %21 = vector.load %arg2[%c2_15, %c0_16, %c0_17] : memref<9x128x4xbf16, #tpu.memory_space<vmem>>, vector<1x128x4xbf16>
    %22 = vector.shape_cast %21 : vector<1x128x4xbf16> to vector<128x4xbf16>
    %cst_18 = arith.constant dense<0.000000e+00> : vector<128x222xf32>
    %23 = tpu.matmul %22, %20, %cst_18 {dimension_numbers = #tpu.dot_dimension_numbers<[1], [0], [0], [1], [0, 0, 1, 1], [], []>} : vector<128x4xbf16>, vector<4x222xbf16>, vector<128x222xf32> -> vector<128x222xf32>
    %24 = arith.addf %17, %23 : vector<128x222xf32>
    %c0_19 = arith.constant 0 : index
    %c0_20 = arith.constant 0 : index
    %c16 = arith.constant 16 : index
    %25 = vector.load %arg1[%c0_19, %c0_20, %c16] : memref<1x4x256xf32, #tpu.memory_space<vmem>>, vector<1x4x222xf32>
    %26 = vector.shape_cast %25 : vector<1x4x222xf32> to vector<4x222xf32>
    %27 = arith.truncf %26 : vector<4x222xf32> to vector<4x222xbf16>
    %c3 = arith.constant 3 : index
    %c0_21 = arith.constant 0 : index
    %c0_22 = arith.constant 0 : index
    %28 = vector.load %arg2[%c3, %c0_21, %c0_22] : memref<9x128x4xbf16, #tpu.memory_space<vmem>>, vector<1x128x4xbf16>
    %29 = vector.shape_cast %28 : vector<1x128x4xbf16> to vector<128x4xbf16>
    %cst_23 = arith.constant dense<0.000000e+00> : vector<128x222xf32>
    %30 = tpu.matmul %29, %27, %cst_23 {dimension_numbers = #tpu.dot_dimension_numbers<[1], [0], [0], [1], [0, 0, 1, 1], [], []>} : vector<128x4xbf16>, vector<4x222xbf16>, vector<128x222xf32> -> vector<128x222xf32>
    %31 = arith.addf %24, %30 : vector<128x222xf32>
    %c0_24 = arith.constant 0 : index
    %c0_25 = arith.constant 0 : index
    %c17 = arith.constant 17 : index
    %32 = vector.load %arg1[%c0_24, %c0_25, %c17] : memref<1x4x256xf32, #tpu.memory_space<vmem>>, vector<1x4x222xf32>
    %33 = vector.shape_cast %32 : vector<1x4x222xf32> to vector<4x222xf32>
    %34 = arith.truncf %33 : vector<4x222xf32> to vector<4x222xbf16>
    %c4 = arith.constant 4 : index
    %c0_26 = arith.constant 0 : index
    %c0_27 = arith.constant 0 : index
    %35 = vector.load %arg2[%c4, %c0_26, %c0_27] : memref<9x128x4xbf16, #tpu.memory_space<vmem>>, vector<1x128x4xbf16>
    %36 = vector.shape_cast %35 : vector<1x128x4xbf16> to vector<128x4xbf16>
    %cst_28 = arith.constant dense<0.000000e+00> : vector<128x222xf32>
    %37 = tpu.matmul %36, %34, %cst_28 {dimension_numbers = #tpu.dot_dimension_numbers<[1], [0], [0], [1], [0, 0, 1, 1], [], []>} : vector<128x4xbf16>, vector<4x222xbf16>, vector<128x222xf32> -> vector<128x222xf32>
    %38 = arith.addf %31, %37 : vector<128x222xf32>
    %c0_29 = arith.constant 0 : index
    %c0_30 = arith.constant 0 : index
    %c18 = arith.constant 18 : index
    %39 = vector.load %arg1[%c0_29, %c0_30, %c18] : memref<1x4x256xf32, #tpu.memory_space<vmem>>, vector<1x4x222xf32>
    %40 = vector.shape_cast %39 : vector<1x4x222xf32> to vector<4x222xf32>
    %41 = arith.truncf %40 : vector<4x222xf32> to vector<4x222xbf16>
    %c5 = arith.constant 5 : index
    %c0_31 = arith.constant 0 : index
    %c0_32 = arith.constant 0 : index
    %42 = vector.load %arg2[%c5, %c0_31, %c0_32] : memref<9x128x4xbf16, #tpu.memory_space<vmem>>, vector<1x128x4xbf16>
    %43 = vector.shape_cast %42 : vector<1x128x4xbf16> to vector<128x4xbf16>
    %cst_33 = arith.constant dense<0.000000e+00> : vector<128x222xf32>
    %44 = tpu.matmul %43, %41, %cst_33 {dimension_numbers = #tpu.dot_dimension_numbers<[1], [0], [0], [1], [0, 0, 1, 1], [], []>} : vector<128x4xbf16>, vector<4x222xbf16>, vector<128x222xf32> -> vector<128x222xf32>
    %45 = arith.addf %38, %44 : vector<128x222xf32>
    %c0_34 = arith.constant 0 : index
    %c0_35 = arith.constant 0 : index
    %c32 = arith.constant 32 : index
    %46 = vector.load %arg1[%c0_34, %c0_35, %c32] : memref<1x4x256xf32, #tpu.memory_space<vmem>>, vector<1x4x222xf32>
    %47 = vector.shape_cast %46 : vector<1x4x222xf32> to vector<4x222xf32>
    %48 = arith.truncf %47 : vector<4x222xf32> to vector<4x222xbf16>
    %c6 = arith.constant 6 : index
    %c0_36 = arith.constant 0 : index
    %c0_37 = arith.constant 0 : index
    %49 = vector.load %arg2[%c6, %c0_36, %c0_37] : memref<9x128x4xbf16, #tpu.memory_space<vmem>>, vector<1x128x4xbf16>
    %50 = vector.shape_cast %49 : vector<1x128x4xbf16> to vector<128x4xbf16>
    %cst_38 = arith.constant dense<0.000000e+00> : vector<128x222xf32>
    %51 = tpu.matmul %50, %48, %cst_38 {dimension_numbers = #tpu.dot_dimension_numbers<[1], [0], [0], [1], [0, 0, 1, 1], [], []>} : vector<128x4xbf16>, vector<4x222xbf16>, vector<128x222xf32> -> vector<128x222xf32>
    %52 = arith.addf %45, %51 : vector<128x222xf32>
    %c0_39 = arith.constant 0 : index
    %c0_40 = arith.constant 0 : index
    %c33 = arith.constant 33 : index
    %53 = vector.load %arg1[%c0_39, %c0_40, %c33] : memref<1x4x256xf32, #tpu.memory_space<vmem>>, vector<1x4x222xf32>
    %54 = vector.shape_cast %53 : vector<1x4x222xf32> to vector<4x222xf32>
    %55 = arith.truncf %54 : vector<4x222xf32> to vector<4x222xbf16>
    %c7 = arith.constant 7 : index
    %c0_41 = arith.constant 0 : index
    %c0_42 = arith.constant 0 : index
    %56 = vector.load %arg2[%c7, %c0_41, %c0_42] : memref<9x128x4xbf16, #tpu.memory_space<vmem>>, vector<1x128x4xbf16>
    %57 = vector.shape_cast %56 : vector<1x128x4xbf16> to vector<128x4xbf16>
    %cst_43 = arith.constant dense<0.000000e+00> : vector<128x222xf32>
    %58 = tpu.matmul %57, %55, %cst_43 {dimension_numbers = #tpu.dot_dimension_numbers<[1], [0], [0], [1], [0, 0, 1, 1], [], []>} : vector<128x4xbf16>, vector<4x222xbf16>, vector<128x222xf32> -> vector<128x222xf32>
    %59 = arith.addf %52, %58 : vector<128x222xf32>
    %c0_44 = arith.constant 0 : index
    %c0_45 = arith.constant 0 : index
    %c34 = arith.constant 34 : index
    %60 = vector.load %arg1[%c0_44, %c0_45, %c34] : memref<1x4x256xf32, #tpu.memory_space<vmem>>, vector<1x4x222xf32>
    %61 = vector.shape_cast %60 : vector<1x4x222xf32> to vector<4x222xf32>
    %62 = arith.truncf %61 : vector<4x222xf32> to vector<4x222xbf16>
    %c8 = arith.constant 8 : index
    %c0_46 = arith.constant 0 : index
    %c0_47 = arith.constant 0 : index
    %63 = vector.load %arg2[%c8, %c0_46, %c0_47] : memref<9x128x4xbf16, #tpu.memory_space<vmem>>, vector<1x128x4xbf16>
    %64 = vector.shape_cast %63 : vector<1x128x4xbf16> to vector<128x4xbf16>
    %cst_48 = arith.constant dense<0.000000e+00> : vector<128x222xf32>
    %65 = tpu.matmul %64, %62, %cst_48 {dimension_numbers = #tpu.dot_dimension_numbers<[1], [0], [0], [1], [0, 0, 1, 1], [], []>} : vector<128x4xbf16>, vector<4x222xbf16>, vector<128x222xf32> -> vector<128x222xf32>
    %66 = arith.addf %59, %65 : vector<128x222xf32>
    %c0_49 = arith.constant 0 : index
    %c0_50 = arith.constant 0 : index
    %67 = vector.load %arg3[%c0_49, %c0_50] : memref<1x222xf32, #tpu.memory_space<vmem>>, vector<1x222xf32>
    %68 = vector.broadcast %67 : vector<1x222xf32> to vector<128x222xf32>
    %69 = arith.mulf %66, %68 : vector<128x222xf32>
    %70 = arith.truncf %69 : vector<128x222xf32> to vector<128x222xbf16>
    %c0_51 = arith.constant 0 : index
    %c0_52 = arith.constant 0 : index
    %c0_53 = arith.constant 0 : index
    %71 = vector.load %arg4[%c0_51, %c0_52, %c0_53] : memref<1x128x222xbf16, #tpu.memory_space<vmem>>, vector<1x128x222xbf16>
    %72 = vector.shape_cast %71 : vector<1x128x222xbf16> to vector<128x222xbf16>
    %73 = vector.shape_cast %70 : vector<128x222xbf16> to vector<1x128x222xbf16>
    tpu.vector_store %arg4[%c0_51, %c0_52, %c0_53], %73 {strides = array<i32>} : memref<1x128x222xbf16, #tpu.memory_space<vmem>>, vector<1x128x222xbf16>,
    %c0_54 = arith.constant 0 : index
    %c0_55 = arith.constant 0 : index
    %74 = vector.load %arg5[%c0_54, %c0_55] : memref<128x1xf32, #tpu.memory_space<vmem>>, vector<128x1xf32>
    %cst_56 = arith.constant dense<0.000000e+00> : vector<128xf32>
    %75 = vector.multi_reduction <add>, %69, %cst_56 [1] : vector<128x222xf32> to vector<128xf32>
    %76 = vector.shape_cast %75 : vector<128xf32> to vector<128x1xf32>
    %77 = arith.addf %74, %76 : vector<128x1xf32>
    %c0_57 = arith.constant 0 : index
    %c0_58 = arith.constant 0 : index
    %78 = vector.load %arg5[%c0_57, %c0_58] : memref<128x1xf32, #tpu.memory_space<vmem>>, vector<128x1xf32>
    tpu.vector_store %arg5[%c0_57, %c0_58], %77 {strides = array<i32>} : memref<128x1xf32, #tpu.memory_space<vmem>>, vector<128x1xf32>,
    %c0_59 = arith.constant 0 : index
    %c0_60 = arith.constant 0 : index
    %79 = vector.load %arg6[%c0_59, %c0_60] : memref<128x1xf32, #tpu.memory_space<vmem>>, vector<128x1xf32>
    %80 = arith.mulf %69, %69 : vector<128x222xf32>
    %cst_61 = arith.constant dense<0.000000e+00> : vector<128xf32>
    %81 = vector.multi_reduction <add>, %80, %cst_61 [1] : vector<128x222xf32> to vector<128xf32>
    %82 = vector.shape_cast %81 : vector<128xf32> to vector<128x1xf32>
    %83 = arith.addf %79, %82 : vector<128x1xf32>
    %c0_62 = arith.constant 0 : index
    %c0_63 = arith.constant 0 : index
    %84 = vector.load %arg6[%c0_62, %c0_63] : memref<128x1xf32, #tpu.memory_space<vmem>>, vector<128x1xf32>
    tpu.vector_store %arg6[%c0_62, %c0_63], %83 {strides = array<i32>} : memref<128x1xf32, #tpu.memory_space<vmem>>, vector<128x1xf32>,
    return
  }
  func.func @transform_0(%arg0: i32) -> (i32, i32, i32) {
    %c0_i32 = arith.constant 0 : i32
    %c0_i32_0 = arith.constant 0 : i32
    %c0_i32_1 = arith.constant 0 : i32
    return %arg0, %c0_i32, %c0_i32_0 : i32, i32, i32
  }
  func.func @transform_1(%arg0: i32) -> (i32, i32, i32) {
    %c0_i32 = arith.constant 0 : i32
    %c0_i32_0 = arith.constant 0 : i32
    %c0_i32_1 = arith.constant 0 : i32
    %c0_i32_2 = arith.constant 0 : i32
    return %c0_i32, %c0_i32_0, %c0_i32_1 : i32, i32, i32
  }
  func.func @transform_2(%arg0: i32) -> (i32, i32) {
    %c0_i32 = arith.constant 0 : i32
    %c0_i32_0 = arith.constant 0 : i32
    %c0_i32_1 = arith.constant 0 : i32
    return %c0_i32, %c0_i32_0 : i32, i32
  }
  func.func @transform_3(%arg0: i32) -> (i32, i32, i32) {
    %c0_i32 = arith.constant 0 : i32
    %c0_i32_0 = arith.constant 0 : i32
    %c0_i32_1 = arith.constant 0 : i32
    return %arg0, %c0_i32, %c0_i32_0 : i32, i32, i32
  }
  func.func @transform_4(%arg0: i32) -> (i32, i32) {
    %c0_i32 = arith.constant 0 : i32
    %c0_i32_0 = arith.constant 0 : i32
    %c0_i32_1 = arith.constant 0 : i32
    return %c0_i32, %c0_i32_0 : i32, i32
  }
  func.func @transform_5(%arg0: i32) -> (i32, i32) {
    %c0_i32 = arith.constant 0 : i32
    %c0_i32_0 = arith.constant 0 : i32
    %c0_i32_1 = arith.constant 0 : i32
    return %c0_i32, %c0_i32_0 : i32, i32
  }
}

</mosaic_0001>

<llo_original>
// kernel: convolutional_block_forward.1
$region0: #{convolutional_block_forward.1}
  #allocation0 [shape = 'u32[]', space=smem, size = 0x4, offset = 0x4, fixed_abs, tag = 'smem constant byte address 0x4 - core index']
  #allocation1 [shape = 'u32[144,128]{1,0:T(1,128)}', space=vmem, size = 0x12000, scoped, tag = 'internal scratch']
  %s0 = inlined_call_operand.vmem [shape: f32[2,4,256], index: 0, kind: input, shape index: {}]
  %s1 = inlined_call_operand.vmem [shape: bf16[9,128,4], index: 1, kind: input, shape index: {}]
  %s2 = inlined_call_operand.vmem [shape: f32[1,222], index: 2, kind: input, shape index: {}]
  %s3 = inlined_call_operand.vmem [shape: bf16[2,128,222], index: 3, kind: output, shape index: {0}]
  %s4 = inlined_call_operand.vmem [shape: f32[128,1], index: 4, kind: output, shape index: {1}]
  %s5 = inlined_call_operand.vmem [shape: f32[128,1], index: 5, kind: output, shape index: {2}]
  %6 = xla_tuple %s3, %s4, %s5
  %s7 = sld [smem:[#allocation0]]
  $region65: #{convolutional_block_forward.1} parent=0
    _
  %s9 = ssub.s32 1, %s7
  %s10 = scalar_select 0, %s9, %s7
  loop: start=0, step=1, limit=4
  $region2: #{convolutional_block_forward.1} parent=0 // loop_pre_header
    _
  $region3: #{convolutional_block_forward.1} parent=0 // loop_header
    %s12 = sphi 0, %s16
    %p13 = scmp.ge.s32.totalorder %s12, 4
    %s22 = sphi 0, %s24
    %s25 = sphi 0, %s22
    %s26 = sphi 0, %s25
    %s42 = sphi 0, %s26
    %s46 = sphi 0, %s46
    %s48 = sphi 0, %s46
    %s49 = sphi 0, %s48
    %s63 = sphi 0, %s49
    %s67 = sphi 0, %s67
    %s69 = sphi 0, %s67
    %s70 = sphi 0, %s69
    %s84 = sphi 0, %s70
    %s90 = sphi 0, %s92
    %s93 = sphi 0, %s90
    %s94 = sphi 0, %s93
    %s110 = sphi 0, %s94
    %s114 = sphi 0, %s114
    %s116 = sphi 0, %s114
    %s117 = sphi 0, %s116
    %s131 = sphi 0, %s117
    %s135 = sphi 0, %s135
    %s137 = sphi 0, %s135
    %s138 = sphi 0, %s137
    %s152 = sphi 0, %s138
  $region4: #{convolutional_block_forward.1} parent=0 // loop_header_branch
    %15 = sbr.rel (%p13) target = $region8
  $region5: #{convolutional_block_forward.1} parent=0 // loop_body
    %s17 = ssub.s32 %s12, 1
    %s18 = ssub.s32 %s12, 2
    %s19 = sadd.s32 %s12, 1
    %s20 = ssub.s32 %s12, %s19
    %p21 = scmp.eq.s32.totalorder %s20, 0
    %s23 = sadd.s32 %s22, 1
    %s24 = scalar_select %p21, %s22, %s23
    %p27 = pneg %p21
    %p28 = scmp.eq.s32.totalorder %s12, 1
    %p29 = por %p27, %p28
    %p30 = scmp.ne.s32.totalorder %s22, %s25
    %p31 = scmp.eq.s32.totalorder %s12, 0
    %p32 = por %p30, %p31
    %p33 = scmp.ne.s32.totalorder %s22, %s25
    %p34 = scmp.eq.s32.totalorder %s17, 1
    %p35 = por %p33, %p34
    %p36 = scmp.ne.s32.totalorder %s25, %s26
    %p37 = scmp.eq.s32.totalorder %s17, 0
    %p38 = por %p36, %p37
    %p39 = scmp.ne.s32.totalorder %s25, %s26
    %p40 = scmp.eq.s32.totalorder %s18, 1
    %p41 = por %p39, %p40
    %p43 = scmp.ne.s32.totalorder %s26, %s42
    %p44 = scmp.eq.s32.totalorder %s18, 0
    %p45 = por %p43, %p44
    %s47 = sadd.s32 %s46, 1
    %p50 = scmp.eq.s32.totalorder %s12, 1
    %p51 = scmp.ne.s32.totalorder %s46, %s48
    %p52 = scmp.eq.s32.totalorder %s12, 0
    %p53 = por %p51, %p52
    %p54 = scmp.ne.s32.totalorder %s46, %s48
    %p55 = scmp.eq.s32.totalorder %s17, 1
    %p56 = por %p54, %p55
    %p57 = scmp.ne.s32.totalorder %s48, %s49
    %p58 = scmp.eq.s32.totalorder %s17, 0
    %p59 = por %p57, %p58
    %p60 = scmp.ne.s32.totalorder %s48, %s49
    %p61 = scmp.eq.s32.totalorder %s18, 1
    %p62 = por %p60, %p61
    %p64 = scmp.ne.s32.totalorder %s49, %s63
    %p65 = scmp.eq.s32.totalorder %s18, 0
    %p66 = por %p64, %p65
    %s68 = sadd.s32 %s67, 1
    %p71 = scmp.eq.s32.totalorder %s12, 1
    %p72 = scmp.ne.s32.totalorder %s67, %s69
    %p73 = scmp.eq.s32.totalorder %s12, 0
    %p74 = por %p72, %p73
    %p75 = scmp.ne.s32.totalorder %s67, %s69
    %p76 = scmp.eq.s32.totalorder %s17, 1
    %p77 = por %p75, %p76
    %p78 = scmp.ne.s32.totalorder %s69, %s70
    %p79 = scmp.eq.s32.totalorder %s17, 0
    %p80 = por %p78, %p79
    %p81 = scmp.ne.s32.totalorder %s69, %s70
    %p82 = scmp.eq.s32.totalorder %s18, 1
    %p83 = por %p81, %p82
    %p85 = scmp.ne.s32.totalorder %s70, %s84
    %p86 = scmp.eq.s32.totalorder %s18, 0
    %p87 = por %p85, %p86
    %s88 = ssub.s32 %s12, %s19
    %p89 = scmp.eq.s32.totalorder %s88, 0
    %s91 = sadd.s32 %s90, 1
    %s92 = scalar_select %p89, %s90, %s91
    %p95 = pneg %p89
    %p96 = scmp.eq.s32.totalorder %s12, 1
    %p97 = por %p95, %p96
    %p98 = scmp.ne.s32.totalorder %s90, %s93
    %p99 = scmp.eq.s32.totalorder %s12, 0
    %p100 = por %p98, %p99
    %p101 = scmp.ne.s32.totalorder %s90, %s93
    %p102 = scmp.eq.s32.totalorder %s17, 1
    %p103 = por %p101, %p102
    %p104 = scmp.ne.s32.totalorder %s93, %s94
    %p105 = scmp.eq.s32.totalorder %s17, 0
    %p106 = por %p104, %p105
    %p107 = scmp.ne.s32.totalorder %s93, %s94
    %p108 = scmp.eq.s32.totalorder %s18, 1
    %p109 = por %p107, %p108
    %p111 = scmp.ne.s32.totalorder %s94, %s110
    %p112 = scmp.eq.s32.totalorder %s18, 0
    %p113 = por %p111, %p112
    %s115 = sadd.s32 %s114, 1
    %p118 = scmp.eq.s32.totalorder %s12, 1
    %p119 = scmp.ne.s32.totalorder %s114, %s116
    %p120 = scmp.eq.s32.totalorder %s12, 0
    %p121 = por %p119, %p120
    %p122 = scmp.ne.s32.totalorder %s114, %s116
    %p123 = scmp.eq.s32.totalorder %s17, 1
    %p124 = por %p122, %p123
    %p125 = scmp.ne.s32.totalorder %s116, %s117
    %p126 = scmp.eq.s32.totalorder %s17, 0
    %p127 = por %p125, %p126
    %p128 = scmp.ne.s32.totalorder %s116, %s117
    %p129 = scmp.eq.s32.totalorder %s18, 1
    %p130 = por %p128, %p129
    %p132 = scmp.ne.s32.totalorder %s117, %s131
    %p133 = scmp.eq.s32.totalorder %s18, 0
    %p134 = por %p132, %p133
    %s136 = sadd.s32 %s135, 1
    %p139 = scmp.eq.s32.totalorder %s12, 1
    %p140 = scmp.ne.s32.totalorder %s135, %s137
    %p141 = scmp.eq.s32.totalorder %s12, 0
    %p142 = por %p140, %p141
    %p143 = scmp.ne.s32.totalorder %s135, %s137
    %p144 = scmp.eq.s32.totalorder %s17, 1
    %p145 = por %p143, %p144
    %p146 = scmp.ne.s32.totalorder %s137, %s138
    %p147 = scmp.eq.s32.totalorder %s17, 0
    %p148 = por %p146, %p147
    %p149 = scmp.ne.s32.totalorder %s137, %s138
    %p150 = scmp.eq.s32.totalorder %s18, 1
    %p151 = por %p149, %p150
    %p153 = scmp.ne.s32.totalorder %s138, %s152
    %p154 = scmp.eq.s32.totalorder %s18, 0
    %p155 = por %p153, %p154
    %p156 = scmp.le.s32.totalorder 1, %s12
    %p157 = scmp.lt.s32.totalorder %s12, 3
    %p158 = pnand %p156, %p157
    %p159 = pneg %p158
    // Predicated region
    $region9: #{convolutional_block_forward.1} parent=5 // pred_check
      _
    $region10: #{convolutional_block_forward.1} parent=5 // pred_check_branch
      %161 = sbr.rel (%p158) target = $region12
    $region11: #{convolutional_block_forward.1} parent=5 // pred_region
      %s162 = ssub.s32 %s12, 1
      // Predicated region
      $region13: #{convolutional_block_forward.1} parent=11 // pred_check
        %p163 = pneg %p59
      $region14: #{convolutional_block_forward.1} parent=11 // pred_check_branch
        %165 = sbr.rel (%p163) target = $region16
      $region15: #{convolutional_block_forward.1} parent=11 // pred_region
        _
      $region16: #{convolutional_block_forward.1} parent=11 // pred_fallthru
        _
      // Predicated region
      $region17: #{convolutional_block_forward.1} parent=11 // pred_check
        %p166 = pneg %p80
      $region18: #{convolutional_block_forward.1} parent=11 // pred_check_branch
        %168 = sbr.rel (%p166) target = $region20
      $region19: #{convolutional_block_forward.1} parent=11 // pred_region
        _
      $region20: #{convolutional_block_forward.1} parent=11 // pred_fallthru
        _
    $region12: #{convolutional_block_forward.1} parent=5 // pred_fallthru
      _
    %p169 = scmp.lt.s32.totalorder %s12, 2
    // Predicated region
    $region21: #{convolutional_block_forward.1} parent=5 // pred_check
      %p170 = pneg %p169
    $region22: #{convolutional_block_forward.1} parent=5 // pred_check_branch
      %172 = sbr.rel (%p170) target = $region24
    $region23: #{convolutional_block_forward.1} parent=5 // pred_region
      // Predicated region
      $region25: #{convolutional_block_forward.1} parent=23 // pred_check
        %p173 = pneg %p32
      $region26: #{convolutional_block_forward.1} parent=23 // pred_check_branch
        %175 = sbr.rel (%p173) target = $region28
      $region27: #{convolutional_block_forward.1} parent=23 // pred_region
        %p176 = scmp.lt.s32.totalorder %s12, 1
        %s177 = scalar_select %p176, %s12, 1
        %s178 = smul.addr %s177, 2
        %s179 = smul.addr %s178, 4
        %s180 = scalar_lea.vmem %s0, %s179
      $region28: #{convolutional_block_forward.1} parent=23 // pred_fallthru
        _
    $region24: #{convolutional_block_forward.1} parent=5 // pred_fallthru
      _
    %p181 = scmp.le.s32.totalorder 1, %s12
    %p182 = scmp.lt.s32.totalorder %s12, 3
    %p183 = pnand %p181, %p182
    %p184 = pneg %p183
    // Predicated region
    $region29: #{convolutional_block_forward.1} parent=5 // pred_check
      _
    $region30: #{convolutional_block_forward.1} parent=5 // pred_check_branch
      %186 = sbr.rel (%p183) target = $region32
    $region31: #{convolutional_block_forward.1} parent=5 // pred_region
      %s187 = ssub.s32 %s12, 1
      %p188 = scmp.lt.s32.totalorder %s17, 1
      %s189 = scalar_select %p188, %s17, 1
      %s190 = smul.addr %s189, 2
      %s191 = smul.addr %s190, 4
      %s192 = scalar_lea.vmem %s0, %s191
      %p193 = pneg %p38
      %p194 = pneg %p35
      %p195 = pneg %p59
      %p196 = pneg %p56
      %p197 = pneg %p80
      %p198 = pneg %p77
      %p199 = pneg %p106
      %p200 = pneg %p103
      %p201 = scmp.lt.s32.totalorder %s17, 1
      %s202 = scalar_select %p201, %s17, 1
      %s203 = smul.addr %s202, 32
      %s204 = smul.addr %s203, 4
      %s205 = scalar_lea.vmem %s3, %s204
      %p206 = pneg %p127
      %p207 = pneg %p124
      %p208 = pneg %p148
      %p209 = pneg %p145
      %p210 = scmp.lt.s32.totalorder %s17, 1
      %s211 = scalar_select %p210, %s17, 1
      %s212 = smul.addr %s211, 2
      %s213 = smul.addr %s212, 4
      %s214 = scalar_lea.vmem %s0, %s213
      %p215 = scmp.lt.s32.totalorder %s17, 1
      %s216 = scalar_select %p215, %s17, 1
      %s217 = smul.addr %s216, 32
      %s218 = smul.addr %s217, 4
      %s219 = scalar_lea.vmem %s3, %s218
      %p221 = scmp.eq.s32.totalorder %s17, 0
      // Predicated region
      $region33: #{convolutional_block_forward.1} parent=31 // pred_check
        %p222 = pneg %p221
      $region34: #{convolutional_block_forward.1} parent=31 // pred_check_branch
        %224 = sbr.rel (%p222) target = $region36
      $region35: #{convolutional_block_forward.1} parent=31 // pred_region
        %vm225 = vcmask 7168
        %226 = vst.msk [vmem:[%s4] sm:$0xff] %vm225, 0.0
        %227 = vst.msk [vmem:[%s4 + $0x8] sm:$0xff] %vm225, 0.0
        %228 = vst.msk [vmem:[%s4 + $0x10] sm:$0xff] %vm225, 0.0
        %229 = vst.msk [vmem:[%s4 + $0x18] sm:$0xff] %vm225, 0.0
        %230 = vst.msk [vmem:[%s4 + $0x20] sm:$0xff] %vm225, 0.0
        %231 = vst.msk [vmem:[%s4 + $0x28] sm:$0xff] %vm225, 0.0
        %232 = vst.msk [vmem:[%s4 + $0x30] sm:$0xff] %vm225, 0.0
        %233 = vst.msk [vmem:[%s4 + $0x38] sm:$0xff] %vm225, 0.0
        %234 = vst.msk [vmem:[%s4 + $0x40] sm:$0xff] %vm225, 0.0
        %235 = vst.msk [vmem:[%s4 + $0x48] sm:$0xff] %vm225, 0.0
        %236 = vst.msk [vmem:[%s4 + $0x50] sm:$0xff] %vm225, 0.0
        %237 = vst.msk [vmem:[%s4 + $0x58] sm:$0xff] %vm225, 0.0
        %238 = vst.msk [vmem:[%s4 + $0x60] sm:$0xff] %vm225, 0.0
        %239 = vst.msk [vmem:[%s4 + $0x68] sm:$0xff] %vm225, 0.0
        %240 = vst.msk [vmem:[%s4 + $0x70] sm:$0xff] %vm225, 0.0
        %241 = vst.msk [vmem:[%s4 + $0x78] sm:$0xff] %vm225, 0.0
        %242 = vst.msk [vmem:[%s5] sm:$0xff] %vm225, 0.0
        %243 = vst.msk [vmem:[%s5 + $0x8] sm:$0xff] %vm225, 0.0
        %244 = vst.msk [vmem:[%s5 + $0x10] sm:$0xff] %vm225, 0.0
        %245 = vst.msk [vmem:[%s5 + $0x18] sm:$0xff] %vm225, 0.0
        %246 = vst.msk [vmem:[%s5 + $0x20] sm:$0xff] %vm225, 0.0
        %247 = vst.msk [vmem:[%s5 + $0x28] sm:$0xff] %vm225, 0.0
        %248 = vst.msk [vmem:[%s5 + $0x30] sm:$0xff] %vm225, 0.0
        %249 = vst.msk [vmem:[%s5 + $0x38] sm:$0xff] %vm225, 0.0
        %250 = vst.msk [vmem:[%s5 + $0x40] sm:$0xff] %vm225, 0.0
        %251 = vst.msk [vmem:[%s5 + $0x48] sm:$0xff] %vm225, 0.0
        %252 = vst.msk [vmem:[%s5 + $0x50] sm:$0xff] %vm225, 0.0
        %253 = vst.msk [vmem:[%s5 + $0x58] sm:$0xff] %vm225, 0.0
        %254 = vst.msk [vmem:[%s5 + $0x60] sm:$0xff] %vm225, 0.0
        %255 = vst.msk [vmem:[%s5 + $0x68] sm:$0xff] %vm225, 0.0
        %256 = vst.msk [vmem:[%s5 + $0x70] sm:$0xff] %vm225, 0.0
        %257 = vst.msk [vmem:[%s5 + $0x78] sm:$0xff] %vm225, 0.0
      $region36: #{convolutional_block_forward.1} parent=31 // pred_fallthru
        _
      %v258 = vld [vmem:[%s214] sm:$0xff]
      %v260 = vcombine.high %v258, %v258
      %v262 = vpack.c.bf16 %v258, %v258
      %v263 = vpack.c.bf16 %v260, %v260
      %v264 = vld [vmem:[%s1] sm:$0xf]
      %v265 = vld [vmem:[%s1 + $0x4] sm:$0xf]
      %v266 = vld [vmem:[%s1 + $0x8] sm:$0xf]
      %v267 = vld [vmem:[%s1 + $0xc] sm:$0xf]
      %v268 = vld [vmem:[%s1 + $0x10] sm:$0xf]
      %v269 = vld [vmem:[%s1 + $0x14] sm:$0xf]
      %v270 = vld [vmem:[%s1 + $0x18] sm:$0xf]
      %v271 = vld [vmem:[%s1 + $0x1c] sm:$0xf]
      %v272 = vld [vmem:[%s1 + $0x20] sm:$0xf]
      %v273 = vld [vmem:[%s1 + $0x24] sm:$0xf]
      %v274 = vld [vmem:[%s1 + $0x28] sm:$0xf]
      %v275 = vld [vmem:[%s1 + $0x2c] sm:$0xf]
      %v276 = vld [vmem:[%s1 + $0x30] sm:$0xf]
      %v277 = vld [vmem:[%s1 + $0x34] sm:$0xf]
      %v278 = vld [vmem:[%s1 + $0x38] sm:$0xf]
      %v279 = vld [vmem:[%s1 + $0x3c] sm:$0xf]
      %s280 = scalar_lea.vmem %s1, 64
      %v281 = vld [vmem:[%s280] sm:$0xf]
      %v282 = vld [vmem:[%s280 + $0x4] sm:$0xf]
      %v283 = vld [vmem:[%s280 + $0x8] sm:$0xf]
      %v284 = vld [vmem:[%s280 + $0xc] sm:$0xf]
      %v285 = vld [vmem:[%s280 + $0x10] sm:$0xf]
      %v286 = vld [vmem:[%s280 + $0x14] sm:$0xf]
      %v287 = vld [vmem:[%s280 + $0x18] sm:$0xf]
      %v288 = vld [vmem:[%s280 + $0x1c] sm:$0xf]
      %v289 = vld [vmem:[%s280 + $0x20] sm:$0xf]
      %v290 = vld [vmem:[%s280 + $0x24] sm:$0xf]
      %v291 = vld [vmem:[%s280 + $0x28] sm:$0xf]
      %v292 = vld [vmem:[%s280 + $0x2c] sm:$0xf]
      %v293 = vld [vmem:[%s280 + $0x30] sm:$0xf]
      %v294 = vld [vmem:[%s280 + $0x34] sm:$0xf]
      %v295 = vld [vmem:[%s280 + $0x38] sm:$0xf]
      %v296 = vld [vmem:[%s280 + $0x3c] sm:$0xf]
      %v313 = vunpack.c.l.b16 %v281
      %v314 = vunpack.c.l.b16 %v282
      %v315 = vunpack.c.l.b16 %v283
      %v316 = vunpack.c.l.b16 %v284
      %v317 = vunpack.c.l.b16 %v285
      %v318 = vunpack.c.l.b16 %v286
      %v319 = vunpack.c.l.b16 %v287
      %v320 = vunpack.c.l.b16 %v288
      %v321 = vunpack.c.l.b16 %v289
      %v322 = vunpack.c.l.b16 %v290
      %v323 = vunpack.c.l.b16 %v291
      %v324 = vunpack.c.l.b16 %v292
      %v325 = vunpack.c.l.b16 %v293
      %v326 = vunpack.c.l.b16 %v294
      %v327 = vunpack.c.l.b16 %v295
      %v328 = vunpack.c.l.b16 %v296
      %v329 = vpack.c.b16 %v314, %v313
      %v330 = vpack.c.b16 %v316, %v315
      %v331 = vpack.c.b16 %v318, %v317
      %v332 = vpack.c.b16 %v320, %v319
      %v333 = vpack.c.b16 %v322, %v321
      %v334 = vpack.c.b16 %v324, %v323
      %v335 = vpack.c.b16 %v326, %v325
      %v336 = vpack.c.b16 %v328, %v327
      %339 = vrot.lane.b32.xlu0 %v262, 127
      %v340 = vpop.permute.xlu0 %339
      %341 = vrot.lane.b32.xlu0 %v263, 127
      %v342 = vpop.permute.xlu0 %341
      %vm343 = vcmask 1039360
      %v344 = vsel %vm343, %v340, %v342
      %vm345 = vcmask 31744
      %v347 = vsel %vm345, %v329, 0
      %v350 = vsel %vm345, %v330, 0
      %v353 = vsel %vm345, %v331, 0
      %v356 = vsel %vm345, %v332, 0
      %v359 = vsel %vm345, %v333, 0
      %v362 = vsel %vm345, %v334, 0
      %v365 = vsel %vm345, %v335, 0
      %v368 = vsel %vm345, %v336, 0
      %vm370 = vcmask 1041408
      %v372 = vsel %vm370, %v344, 0
      %v375 = vsel %vm370, %v342, 0
      %377 = vmatprep.subr.bf16.mxu0 %v375
      %378 = vmatpush1.bf16.msra.mxu0 %v372
      %379 = vmatprep.subr.bf16.mxu0 0
      %380 = vmatpush1.bf16.msra.mxu0 0
      %381 = vmatprep.subr.bf16.mxu0 0
      %382 = vmatpush1.bf16.msra.mxu0 0
      %383 = vmatprep.subr.bf16.mxu0 0
      %384 = vmatpush1.bf16.msra.mxu0 0
      %385 = vmatprep.subr.bf16.mxu0 0
      %386 = vmatpush1.bf16.msra.mxu0 0
      %387 = vmatprep.subr.bf16.mxu0 0
      %388 = vmatpush1.bf16.msra.mxu0 0
      %389 = vmatprep.subr.bf16.mxu0 0
      %390 = vmatpush1.bf16.msra.mxu0 0
      %391 = vmatprep.subr.bf16.mxu0 0
      %392 = vmatpush1.bf16.msra.mxu0 0
      %393 = vmatprep.subr.bf16.mxu0 0
      %394 = vmatpush1.bf16.msra.mxu0 0
      %395 = vmatprep.subr.bf16.mxu0 0
      %396 = vmatpush1.bf16.msra.mxu0 0
      %397 = vmatprep.subr.bf16.mxu0 0
      %398 = vmatpush1.bf16.msra.mxu0 0
      %399 = vmatprep.subr.bf16.mxu0 0
      %400 = vmatpush1.bf16.msra.mxu0 0
      %401 = vmatprep.subr.bf16.mxu0 0
      %402 = vmatpush1.bf16.msra.mxu0 0
      %403 = vmatprep.subr.bf16.mxu0 0
      %404 = vmatpush1.bf16.msra.mxu0 0
      %405 = vmatprep.subr.bf16.mxu0 0
      %406 = vmatpush1.bf16.msra.mxu0 0
      %407 = vmatprep.subr.bf16.mxu0 0
      %408 = vmatpush1.bf16.msra.mxu0 0
      %409 = vmatprep.mubr.bf16.mxu0 0
      %410 = vmatmul.mubr.bf16.gmra.mrb[0].mxu0 %v347
      %v411 = vpop.f32.mrb[0].mxu0
      %v412 = vadd.f32 0.0, %v411
      %v413 = vpop.f32.mrb[0].mxu0
      %v414 = vadd.f32 0.0, %v413
      %v415 = vpop.f32.mrb[0].mxu0
      %v416 = vadd.f32 0.0, %v415
      %v417 = vpop.f32.mrb[0].mxu0
      %v418 = vadd.f32 0.0, %v417
      %419 = vmatprep.mubr.bf16.mxu0 0
      %420 = vmatmul.mubr.bf16.gmra.mrb[0].mxu0 %v350
      %v421 = vpop.f32.mrb[0].mxu0
      %v422 = vadd.f32 0.0, %v421
      %v423 = vpop.f32.mrb[0].mxu0
      %v424 = vadd.f32 0.0, %v423
      %v425 = vpop.f32.mrb[0].mxu0
      %v426 = vadd.f32 0.0, %v425
      %v427 = vpop.f32.mrb[0].mxu0
      %v428 = vadd.f32 0.0, %v427
      %429 = vmatprep.mubr.bf16.mxu0 0
      %430 = vmatmul.mubr.bf16.gmra.mrb[0].mxu0 %v353
      %v431 = vpop.f32.mrb[0].mxu0
      %v432 = vadd.f32 0.0, %v431
      %v433 = vpop.f32.mrb[0].mxu0
      %v434 = vadd.f32 0.0, %v433
      %v435 = vpop.f32.mrb[0].mxu0
      %v436 = vadd.f32 0.0, %v435
      %v437 = vpop.f32.mrb[0].mxu0
      %v438 = vadd.f32 0.0, %v437
      %439 = vmatprep.mubr.bf16.mxu0 0
      %440 = vmatmul.mubr.bf16.gmra.mrb[0].mxu0 %v356
      %v441 = vpop.f32.mrb[0].mxu0
      %v442 = vadd.f32 0.0, %v441
      %v443 = vpop.f32.mrb[0].mxu0
      %v444 = vadd.f32 0.0, %v443
      %v445 = vpop.f32.mrb[0].mxu0
      %v446 = vadd.f32 0.0, %v445
      %v447 = vpop.f32.mrb[0].mxu0
      %v448 = vadd.f32 0.0, %v447
      %449 = vmatprep.mubr.bf16.mxu0 0
      %450 = vmatmul.mubr.bf16.gmra.mrb[0].mxu0 %v359
      %v451 = vpop.f32.mrb[0].mxu0
      %v452 = vadd.f32 0.0, %v451
      %v453 = vpop.f32.mrb[0].mxu0
      %v454 = vadd.f32 0.0, %v453
      %v455 = vpop.f32.mrb[0].mxu0
      %v456 = vadd.f32 0.0, %v455
      %v457 = vpop.f32.mrb[0].mxu0
      %v458 = vadd.f32 0.0, %v457
      %459 = vmatprep.mubr.bf16.mxu0 0
      %460 = vmatmul.mubr.bf16.gmra.mrb[0].mxu0 %v362
      %v461 = vpop.f32.mrb[0].mxu0
      %v462 = vadd.f32 0.0, %v461
      %v463 = vpop.f32.mrb[0].mxu0
      %v464 = vadd.f32 0.0, %v463
      %v465 = vpop.f32.mrb[0].mxu0
      %v466 = vadd.f32 0.0, %v465
      %v467 = vpop.f32.mrb[0].mxu0
      %v468 = vadd.f32 0.0, %v467
      %469 = vmatprep.mubr.bf16.mxu0 0
      %470 = vmatmul.mubr.bf16.gmra.mrb[0].mxu0 %v365
      %v471 = vpop.f32.mrb[0].mxu0
      %v472 = vadd.f32 0.0, %v471
      %v473 = vpop.f32.mrb[0].mxu0
      %v474 = vadd.f32 0.0, %v473
      %v475 = vpop.f32.mrb[0].mxu0
      %v476 = vadd.f32 0.0, %v475
      %v477 = vpop.f32.mrb[0].mxu0
      %v478 = vadd.f32 0.0, %v477
      %479 = vmatprep.mubr.bf16.mxu0 0
      %480 = vmatmul.mubr.bf16.gmra.mrb[0].mxu0 %v368
      %v481 = vpop.f32.mrb[0].mxu0
      %v482 = vadd.f32 0.0, %v481
      %v483 = vpop.f32.mrb[0].mxu0
      %v484 = vadd.f32 0.0, %v483
      %v485 = vpop.f32.mrb[0].mxu0
      %v486 = vadd.f32 0.0, %v485
      %v487 = vpop.f32.mrb[0].mxu0
      %v488 = vadd.f32 0.0, %v487
      %489 = vdwg.mxu0
      %v506 = vunpack.c.l.b16 %v264
      %v507 = vunpack.c.l.b16 %v265
      %v508 = vunpack.c.l.b16 %v266
      %v509 = vunpack.c.l.b16 %v267
      %v510 = vunpack.c.l.b16 %v268
      %v511 = vunpack.c.l.b16 %v269
      %v512 = vunpack.c.l.b16 %v270
      %v513 = vunpack.c.l.b16 %v271
      %v514 = vunpack.c.l.b16 %v272
      %v515 = vunpack.c.l.b16 %v273
      %v516 = vunpack.c.l.b16 %v274
      %v517 = vunpack.c.l.b16 %v275
      %v518 = vunpack.c.l.b16 %v276
      %v519 = vunpack.c.l.b16 %v277
      %v520 = vunpack.c.l.b16 %v278
      %v521 = vunpack.c.l.b16 %v279
      %v522 = vpack.c.b16 %v507, %v506
      %v523 = vpack.c.b16 %v509, %v508
      %v524 = vpack.c.b16 %v511, %v510
      %v525 = vpack.c.b16 %v513, %v512
      %v526 = vpack.c.b16 %v515, %v514
      %v527 = vpack.c.b16 %v517, %v516
      %v528 = vpack.c.b16 %v519, %v518
      %v529 = vpack.c.b16 %v521, %v520
      %v531 = vsel %vm345, %v522, 0
      %v534 = vsel %vm345, %v523, 0
      %v537 = vsel %vm345, %v524, 0
      %v540 = vsel %vm345, %v525, 0
      %v543 = vsel %vm345, %v526, 0
      %v546 = vsel %vm345, %v527, 0
      %v549 = vsel %vm345, %v528, 0
      %v552 = vsel %vm345, %v529, 0
      %v555 = vsel %vm370, %v262, 0
      %v558 = vsel %vm370, %v263, 0
      %560 = vmatprep.subr.bf16.mxu0 %v558
      %561 = vmatpush1.bf16.msra.mxu0 %v555
      %562 = vmatprep.subr.bf16.mxu0 0
      %563 = vmatpush1.bf16.msra.mxu0 0
      %564 = vmatprep.subr.bf16.mxu0 0
      %565 = vmatpush1.bf16.msra.mxu0 0
      %566 = vmatprep.subr.bf16.mxu0 0
      %567 = vmatpush1.bf16.msra.mxu0 0
      %568 = vmatprep.subr.bf16.mxu0 0
      %569 = vmatpush1.bf16.msra.mxu0 0
      %570 = vmatprep.subr.bf16.mxu0 0
      %571 = vmatpush1.bf16.msra.mxu0 0
      %572 = vmatprep.subr.bf16.mxu0 0
      %573 = vmatpush1.bf16.msra.mxu0 0
      %574 = vmatprep.subr.bf16.mxu0 0
      %575 = vmatpush1.bf16.msra.mxu0 0
      %576 = vmatprep.subr.bf16.mxu0 0
      %577 = vmatpush1.bf16.msra.mxu0 0
      %578 = vmatprep.subr.bf16.mxu0 0
      %579 = vmatpush1.bf16.msra.mxu0 0
      %580 = vmatprep.subr.bf16.mxu0 0
      %581 = vmatpush1.bf16.msra.mxu0 0
      %582 = vmatprep.subr.bf16.mxu0 0
      %583 = vmatpush1.bf16.msra.mxu0 0
      %584 = vmatprep.subr.bf16.mxu0 0
      %585 = vmatpush1.bf16.msra.mxu0 0
      %586 = vmatprep.subr.bf16.mxu0 0
      %587 = vmatpush1.bf16.msra.mxu0 0
      %588 = vmatprep.subr.bf16.mxu0 0
      %589 = vmatpush1.bf16.msra.mxu0 0
      %590 = vmatprep.subr.bf16.mxu0 0
      %591 = vmatpush1.bf16.msra.mxu0 0
      %592 = vmatprep.mubr.bf16.mxu0 0
      %593 = vmatmul.mubr.bf16.gmra.mrb[0].mxu0 %v531
      %v594 = vpop.f32.mrb[0].mxu0
      %v595 = vadd.f32 %v412, %v594
      %v596 = vpop.f32.mrb[0].mxu0
      %v597 = vadd.f32 %v414, %v596
      %v598 = vpop.f32.mrb[0].mxu0
      %v599 = vadd.f32 %v416, %v598
      %v600 = vpop.f32.mrb[0].mxu0
      %v601 = vadd.f32 %v418, %v600
      %602 = vmatprep.mubr.bf16.mxu0 0
      %603 = vmatmul.mubr.bf16.gmra.mrb[0].mxu0 %v534
      %v604 = vpop.f32.mrb[0].mxu0
      %v605 = vadd.f32 %v422, %v604
      %v606 = vpop.f32.mrb[0].mxu0
      %v607 = vadd.f32 %v424, %v606
      %v608 = vpop.f32.mrb[0].mxu0
      %v609 = vadd.f32 %v426, %v608
      %v610 = vpop.f32.mrb[0].mxu0
      %v611 = vadd.f32 %v428, %v610
      %612 = vmatprep.mubr.bf16.mxu0 0
      %613 = vmatmul.mubr.bf16.gmra.mrb[0].mxu0 %v537
      %v614 = vpop.f32.mrb[0].mxu0
      %v615 = vadd.f32 %v432, %v614
      %v616 = vpop.f32.mrb[0].mxu0
      %v617 = vadd.f32 %v434, %v616
      %v618 = vpop.f32.mrb[0].mxu0
      %v619 = vadd.f32 %v436, %v618
      %v620 = vpop.f32.mrb[0].mxu0
      %v621 = vadd.f32 %v438, %v620
      %622 = vmatprep.mubr.bf16.mxu0 0
      %623 = vmatmul.mubr.bf16.gmra.mrb[0].mxu0 %v540
      %v624 = vpop.f32.mrb[0].mxu0
      %v625 = vadd.f32 %v442, %v624
      %v626 = vpop.f32.mrb[0].mxu0
      %v627 = vadd.f32 %v444, %v626
      %v628 = vpop.f32.mrb[0].mxu0
      %v629 = vadd.f32 %v446, %v628
      %v630 = vpop.f32.mrb[0].mxu0
      %v631 = vadd.f32 %v448, %v630
      %632 = vmatprep.mubr.bf16.mxu0 0
      %633 = vmatmul.mubr.bf16.gmra.mrb[0].mxu0 %v543
      %v634 = vpop.f32.mrb[0].mxu0
      %v635 = vadd.f32 %v452, %v634
      %v636 = vpop.f32.mrb[0].mxu0
      %v637 = vadd.f32 %v454, %v636
      %v638 = vpop.f32.mrb[0].mxu0
      %v639 = vadd.f32 %v456, %v638
      %v640 = vpop.f32.mrb[0].mxu0
      %v641 = vadd.f32 %v458, %v640
      %642 = vmatprep.mubr.bf16.mxu0 0
      %643 = vmatmul.mubr.bf16.gmra.mrb[0].mxu0 %v546
      %v644 = vpop.f32.mrb[0].mxu0
      %v645 = vadd.f32 %v462, %v644
      %v646 = vpop.f32.mrb[0].mxu0
      %v647 = vadd.f32 %v464, %v646
      %v648 = vpop.f32.mrb[0].mxu0
      %v649 = vadd.f32 %v466, %v648
      %v650 = vpop.f32.mrb[0].mxu0
      %v651 = vadd.f32 %v468, %v650
      %652 = vmatprep.mubr.bf16.mxu0 0
      %653 = vmatmul.mubr.bf16.gmra.mrb[0].mxu0 %v549
      %v654 = vpop.f32.mrb[0].mxu0
      %v655 = vadd.f32 %v472, %v654
      %v656 = vpop.f32.mrb[0].mxu0
      %v657 = vadd.f32 %v474, %v656
      %v658 = vpop.f32.mrb[0].mxu0
      %v659 = vadd.f32 %v476, %v658
      %v660 = vpop.f32.mrb[0].mxu0
      %v661 = vadd.f32 %v478, %v660
      %662 = vmatprep.mubr.bf16.mxu0 0
      %663 = vmatmul.mubr.bf16.gmra.mrb[0].mxu0 %v552
      %v664 = vpop.f32.mrb[0].mxu0
      %v665 = vadd.f32 %v482, %v664
      %v666 = vpop.f32.mrb[0].mxu0
      %v667 = vadd.f32 %v484, %v666
      %v668 = vpop.f32.mrb[0].mxu0
      %v669 = vadd.f32 %v486, %v668
      %v670 = vpop.f32.mrb[0].mxu0
      %v671 = vadd.f32 %v488, %v670
      %672 = vdwg.mxu0
      %v673 = vld [vmem:[%s214] sm:$0xff]
      %v675 = vcombine.high %v673, %v673
      %v677 = vpack.c.bf16 %v673, %v673
      %v678 = vpack.c.bf16 %v675, %v675
      %s679 = scalar_lea.vmem %s1, 128
      %v680 = vld [vmem:[%s679] sm:$0xf]
      %v681 = vld [vmem:[%s679 + $0x4] sm:$0xf]
      %v682 = vld [vmem:[%s679 + $0x8] sm:$0xf]
      %v683 = vld [vmem:[%s679 + $0xc] sm:$0xf]
      %v684 = vld [vmem:[%s679 + $0x10] sm:$0xf]
      %v685 = vld [vmem:[%s679 + $0x14] sm:$0xf]
      %v686 = vld [vmem:[%s679 + $0x18] sm:$0xf]
      %v687 = vld [vmem:[%s679 + $0x1c] sm:$0xf]
      %v688 = vld [vmem:[%s679 + $0x20] sm:$0xf]
      %v689 = vld [vmem:[%s679 + $0x24] sm:$0xf]
      %v690 = vld [vmem:[%s679 + $0x28] sm:$0xf]
      %v691 = vld [vmem:[%s679 + $0x2c] sm:$0xf]
      %v692 = vld [vmem:[%s679 + $0x30] sm:$0xf]
      %v693 = vld [vmem:[%s679 + $0x34] sm:$0xf]
      %v694 = vld [vmem:[%s679 + $0x38] sm:$0xf]
      %v695 = vld [vmem:[%s679 + $0x3c] sm:$0xf]
      %v712 = vunpack.c.l.b16 %v680
      %v713 = vunpack.c.l.b16 %v681
      %v714 = vunpack.c.l.b16 %v682
      %v715 = vunpack.c.l.b16 %v683
      %v716 = vunpack.c.l.b16 %v684
      %v717 = vunpack.c.l.b16 %v685
      %v718 = vunpack.c.l.b16 %v686
      %v719 = vunpack.c.l.b16 %v687
      %v720 = vunpack.c.l.b16 %v688
      %v721 = vunpack.c.l.b16 %v689
      %v722 = vunpack.c.l.b16 %v690
      %v723 = vunpack.c.l.b16 %v691
      %v724 = vunpack.c.l.b16 %v692
      %v725 = vunpack.c.l.b16 %v693
      %v726 = vunpack.c.l.b16 %v694
      %v727 = vunpack.c.l.b16 %v695
      %v728 = vpack.c.b16 %v713, %v712
      %v729 = vpack.c.b16 %v715, %v714
      %v730 = vpack.c.b16 %v717, %v716
      %v731 = vpack.c.b16 %v719, %v718
      %v732 = vpack.c.b16 %v721, %v720
      %v733 = vpack.c.b16 %v723, %v722
      %v734 = vpack.c.b16 %v725, %v724
      %v735 = vpack.c.b16 %v727, %v726
      %738 = vrot.lane.b32.xlu0 %v677, 126
      %v739 = vpop.permute.xlu0 %738
      %740 = vrot.lane.b32.xlu0 %v678, 126
      %v741 = vpop.permute.xlu0 %740
      %vm742 = vcmask 1031168
      %v743 = vsel %vm742, %v739, %v741
      %v745 = vsel %vm345, %v728, 0
      %v748 = vsel %vm345, %v729, 0
      %v751 = vsel %vm345, %v730, 0
      %v754 = vsel %vm345, %v731, 0
      %v757 = vsel %vm345, %v732, 0
      %v760 = vsel %vm345, %v733, 0
      %v763 = vsel %vm345, %v734, 0
      %v766 = vsel %vm345, %v735, 0
      %v769 = vsel %vm370, %v743, 0
      %v772 = vsel %vm370, %v741, 0
      %774 = vmatprep.subr.bf16.mxu0 %v772
      %775 = vmatpush1.bf16.msra.mxu0 %v769
      %776 = vmatprep.subr.bf16.mxu0 0
      %777 = vmatpush1.bf16.msra.mxu0 0
      %778 = vmatprep.subr.bf16.mxu0 0
      %779 = vmatpush1.bf16.msra.mxu0 0
      %780 = vmatprep.subr.bf16.mxu0 0
      %781 = vmatpush1.bf16.msra.mxu0 0
      %782 = vmatprep.subr.bf16.mxu0 0
      %783 = vmatpush1.bf16.msra.mxu0 0
      %784 = vmatprep.subr.bf16.mxu0 0
      %785 = vmatpush1.bf16.msra.mxu0 0
      %786 = vmatprep.subr.bf16.mxu0 0
      %787 = vmatpush1.bf16.msra.mxu0 0
      %788 = vmatprep.subr.bf16.mxu0 0
      %789 = vmatpush1.bf16.msra.mxu0 0
      %790 = vmatprep.subr.bf16.mxu0 0
      %791 = vmatpush1.bf16.msra.mxu0 0
      %792 = vmatprep.subr.bf16.mxu0 0
      %793 = vmatpush1.bf16.msra.mxu0 0
      %794 = vmatprep.subr.bf16.mxu0 0
      %795 = vmatpush1.bf16.msra.mxu0 0
      %796 = vmatprep.subr.bf16.mxu0 0
      %797 = vmatpush1.bf16.msra.mxu0 0
      %798 = vmatprep.subr.bf16.mxu0 0
      %799 = vmatpush1.bf16.msra.mxu0 0
      %800 = vmatprep.subr.bf16.mxu0 0
      %801 = vmatpush1.bf16.msra.mxu0 0
      %802 = vmatprep.subr.bf16.mxu0 0
      %803 = vmatpush1.bf16.msra.mxu0 0
      %804 = vmatprep.subr.bf16.mxu0 0
      %805 = vmatpush1.bf16.msra.mxu0 0
      %806 = vmatprep.mubr.bf16.mxu0 0
      %807 = vmatmul.mubr.bf16.gmra.mrb[0].mxu0 %v745
      %v808 = vpop.f32.mrb[0].mxu0
      %v809 = vadd.f32 0.0, %v808
      %v810 = vpop.f32.mrb[0].mxu0
      %v811 = vadd.f32 0.0, %v810
      %v812 = vpop.f32.mrb[0].mxu0
      %v813 = vadd.f32 0.0, %v812
      %v814 = vpop.f32.mrb[0].mxu0
      %v815 = vadd.f32 0.0, %v814
      %816 = vmatprep.mubr.bf16.mxu0 0
      %817 = vmatmul.mubr.bf16.gmra.mrb[0].mxu0 %v748
      %v818 = vpop.f32.mrb[0].mxu0
      %v819 = vadd.f32 0.0, %v818
      %v820 = vpop.f32.mrb[0].mxu0
      %v821 = vadd.f32 0.0, %v820
      %v822 = vpop.f32.mrb[0].mxu0
      %v823 = vadd.f32 0.0, %v822
      %v824 = vpop.f32.mrb[0].mxu0
      %v825 = vadd.f32 0.0, %v824
      %826 = vmatprep.mubr.bf16.mxu0 0
      %827 = vmatmul.mubr.bf16.gmra.mrb[0].mxu0 %v751
      %v828 = vpop.f32.mrb[0].mxu0
      %v829 = vadd.f32 0.0, %v828
      %v830 = vpop.f32.mrb[0].mxu0
      %v831 = vadd.f32 0.0, %v830
      %v832 = vpop.f32.mrb[0].mxu0
      %v833 = vadd.f32 0.0, %v832
      %v834 = vpop.f32.mrb[0].mxu0
      %v835 = vadd.f32 0.0, %v834
      %836 = vmatprep.mubr.bf16.mxu0 0
      %837 = vmatmul.mubr.bf16.gmra.mrb[0].mxu0 %v754
      %v838 = vpop.f32.mrb[0].mxu0
      %v839 = vadd.f32 0.0, %v838
      %v840 = vpop.f32.mrb[0].mxu0
      %v841 = vadd.f32 0.0, %v840
      %v842 = vpop.f32.mrb[0].mxu0
      %v843 = vadd.f32 0.0, %v842
      %v844 = vpop.f32.mrb[0].mxu0
      %v845 = vadd.f32 0.0, %v844
      %846 = vmatprep.mubr.bf16.mxu0 0
      %847 = vmatmul.mubr.bf16.gmra.mrb[0].mxu0 %v757
      %v848 = vpop.f32.mrb[0].mxu0
      %v849 = vadd.f32 0.0, %v848
      %v850 = vpop.f32.mrb[0].mxu0
      %v851 = vadd.f32 0.0, %v850
      %v852 = vpop.f32.mrb[0].mxu0
      %v853 = vadd.f32 0.0, %v852
      %v854 = vpop.f32.mrb[0].mxu0
      %v855 = vadd.f32 0.0, %v854
      %856 = vmatprep.mubr.bf16.mxu0 0
      %857 = vmatmul.mubr.bf16.gmra.mrb[0].mxu0 %v760
      %v858 = vpop.f32.mrb[0].mxu0
      %v859 = vadd.f32 0.0, %v858
      %v860 = vpop.f32.mrb[0].mxu0
      %v861 = vadd.f32 0.0, %v860
      %v862 = vpop.f32.mrb[0].mxu0
      %v863 = vadd.f32 0.0, %v862
      %v864 = vpop.f32.mrb[0].mxu0
      %v865 = vadd.f32 0.0, %v864
      %866 = vmatprep.mubr.bf16.mxu0 0
      %867 = vmatmul.mubr.bf16.gmra.mrb[0].mxu0 %v763
      %v868 = vpop.f32.mrb[0].mxu0
      %v869 = vadd.f32 0.0, %v868
      %v870 = vpop.f32.mrb[0].mxu0
      %v871 = vadd.f32 0.0, %v870
      %v872 = vpop.f32.mrb[0].mxu0
      %v873 = vadd.f32 0.0, %v872
      %v874 = vpop.f32.mrb[0].mxu0
      %v875 = vadd.f32 0.0, %v874
      %876 = vmatprep.mubr.bf16.mxu0 0
      %877 = vmatmul.mubr.bf16.gmra.mrb[0].mxu0 %v766
      %v878 = vpop.f32.mrb[0].mxu0
      %v879 = vadd.f32 0.0, %v878
      %v880 = vpop.f32.mrb[0].mxu0
      %v881 = vadd.f32 0.0, %v880
      %v882 = vpop.f32.mrb[0].mxu0
      %v883 = vadd.f32 0.0, %v882
      %v884 = vpop.f32.mrb[0].mxu0
      %v885 = vadd.f32 0.0, %v884
      %886 = vdwg.mxu0
      %v887 = vadd.f32 %v595, %v809
      %v888 = vadd.f32 %v597, %v811
      %v889 = vadd.f32 %v599, %v813
      %v890 = vadd.f32 %v601, %v815
      %v891 = vadd.f32 %v605, %v819
      %v892 = vadd.f32 %v607, %v821
      %v893 = vadd.f32 %v609, %v823
      %v894 = vadd.f32 %v611, %v825
      %v895 = vadd.f32 %v615, %v829
      %v896 = vadd.f32 %v617, %v831
      %v897 = vadd.f32 %v619, %v833
      %v898 = vadd.f32 %v621, %v835
      %v899 = vadd.f32 %v625, %v839
      %v900 = vadd.f32 %v627, %v841
      %v901 = vadd.f32 %v629, %v843
      %v902 = vadd.f32 %v631, %v845
      %v903 = vadd.f32 %v635, %v849
      %v904 = vadd.f32 %v637, %v851
      %v905 = vadd.f32 %v639, %v853
      %v906 = vadd.f32 %v641, %v855
      %v907 = vadd.f32 %v645, %v859
      %v908 = vadd.f32 %v647, %v861
      %v909 = vadd.f32 %v649, %v863
      %v910 = vadd.f32 %v651, %v865
      %v911 = vadd.f32 %v655, %v869
      %v912 = vadd.f32 %v657, %v871
      %v913 = vadd.f32 %v659, %v873
      %v914 = vadd.f32 %v661, %v875
      %v915 = vadd.f32 %v665, %v879
      %v916 = vadd.f32 %v667, %v881
      %v917 = vadd.f32 %v669, %v883
      %v918 = vadd.f32 %v671, %v885
      %v919 = vld [vmem:[%s214] sm:$0xff]
      %v921 = vcombine.high %v919, %v919
      %v923 = vpack.c.bf16 %v919, %v919
      %v924 = vpack.c.bf16 %v921, %v921
      %s925 = scalar_lea.vmem %s1, 192
      %v926 = vld [vmem:[%s925] sm:$0xf]
      %v927 = vld [vmem:[%s925 + $0x4] sm:$0xf]
      %v928 = vld [vmem:[%s925 + $0x8] sm:$0xf]
      %v929 = vld [vmem:[%s925 + $0xc] sm:$0xf]
      %v930 = vld [vmem:[%s925 + $0x10] sm:$0xf]
      %v931 = vld [vmem:[%s925 + $0x14] sm:$0xf]
      %v932 = vld [vmem:[%s925 + $0x18] sm:$0xf]
      %v933 = vld [vmem:[%s925 + $0x1c] sm:$0xf]
      %v934 = vld [vmem:[%s925 + $0x20] sm:$0xf]
      %v935 = vld [vmem:[%s925 + $0x24] sm:$0xf]
      %v936 = vld [vmem:[%s925 + $0x28] sm:$0xf]
      %v937 = vld [vmem:[%s925 + $0x2c] sm:$0xf]
      %v938 = vld [vmem:[%s925 + $0x30] sm:$0xf]
      %v939 = vld [vmem:[%s925 + $0x34] sm:$0xf]
      %v940 = vld [vmem:[%s925 + $0x38] sm:$0xf]
      %v941 = vld [vmem:[%s925 + $0x3c] sm:$0xf]
      %v958 = vunpack.c.l.b16 %v926
      %v959 = vunpack.c.l.b16 %v927
      %v960 = vunpack.c.l.b16 %v928
      %v961 = vunpack.c.l.b16 %v929
      %v962 = vunpack.c.l.b16 %v930
      %v963 = vunpack.c.l.b16 %v931
      %v964 = vunpack.c.l.b16 %v932
      %v965 = vunpack.c.l.b16 %v933
      %v966 = vunpack.c.l.b16 %v934
      %v967 = vunpack.c.l.b16 %v935
      %v968 = vunpack.c.l.b16 %v936
      %v969 = vunpack.c.l.b16 %v937
      %v970 = vunpack.c.l.b16 %v938
      %v971 = vunpack.c.l.b16 %v939
      %v972 = vunpack.c.l.b16 %v940
      %v973 = vunpack.c.l.b16 %v941
      %v974 = vpack.c.b16 %v959, %v958
      %v975 = vpack.c.b16 %v961, %v960
      %v976 = vpack.c.b16 %v963, %v962
      %v977 = vpack.c.b16 %v965, %v964
      %v978 = vpack.c.b16 %v967, %v966
      %v979 = vpack.c.b16 %v969, %v968
      %v980 = vpack.c.b16 %v971, %v970
      %v981 = vpack.c.b16 %v973, %v972
      %984 = vrot.lane.b32.xlu0 %v923, 112
      %v985 = vpop.permute.xlu0 %984
      %986 = vrot.lane.b32.xlu0 %v924, 112
      %v987 = vpop.permute.xlu0 %986
      %vm988 = vcmask 916480
      %v989 = vsel %vm988, %v985, %v987
      %v991 = vsel %vm345, %v974, 0
      %v994 = vsel %vm345, %v975, 0
      %v997 = vsel %vm345, %v976, 0
      %v1000 = vsel %vm345, %v977, 0
      %v1003 = vsel %vm345, %v978, 0
      %v1006 = vsel %vm345, %v979, 0
      %v1009 = vsel %vm345, %v980, 0
      %v1012 = vsel %vm345, %v981, 0
      %v1015 = vsel %vm370, %v989, 0
      %v1018 = vsel %vm370, %v987, 0
      %1020 = vmatprep.subr.bf16.mxu0 %v1018
      %1021 = vmatpush1.bf16.msra.mxu0 %v1015
      %1022 = vmatprep.subr.bf16.mxu0 0
      %1023 = vmatpush1.bf16.msra.mxu0 0
      %1024 = vmatprep.subr.bf16.mxu0 0
      %1025 = vmatpush1.bf16.msra.mxu0 0
      %1026 = vmatprep.subr.bf16.mxu0 0
      %1027 = vmatpush1.bf16.msra.mxu0 0
      %1028 = vmatprep.subr.bf16.mxu0 0
      %1029 = vmatpush1.bf16.msra.mxu0 0
      %1030 = vmatprep.subr.bf16.mxu0 0
      %1031 = vmatpush1.bf16.msra.mxu0 0
      %1032 = vmatprep.subr.bf16.mxu0 0
      %1033 = vmatpush1.bf16.msra.mxu0 0
      %1034 = vmatprep.subr.bf16.mxu0 0
      %1035 = vmatpush1.bf16.msra.mxu0 0
      %1036 = vmatprep.subr.bf16.mxu0 0
      %1037 = vmatpush1.bf16.msra.mxu0 0
      %1038 = vmatprep.subr.bf16.mxu0 0
      %1039 = vmatpush1.bf16.msra.mxu0 0
      %1040 = vmatprep.subr.bf16.mxu0 0
      %1041 = vmatpush1.bf16.msra.mxu0 0
      %1042 = vmatprep.subr.bf16.mxu0 0
      %1043 = vmatpush1.bf16.msra.mxu0 0
      %1044 = vmatprep.subr.bf16.mxu0 0
      %1045 = vmatpush1.bf16.msra.mxu0 0
      %1046 = vmatprep.subr.bf16.mxu0 0
      %1047 = vmatpush1.bf16.msra.mxu0 0
      %1048 = vmatprep.subr.bf16.mxu0 0
      %1049 = vmatpush1.bf16.msra.mxu0 0
      %1050 = vmatprep.subr.bf16.mxu0 0
      %1051 = vmatpush1.bf16.msra.mxu0 0
      %1052 = vmatprep.mubr.bf16.mxu0 0
      %1053 = vmatmul.mubr.bf16.gmra.mrb[0].mxu0 %v991
      %v1054 = vpop.f32.mrb[0].mxu0
      %v1055 = vadd.f32 0.0, %v1054
      %v1056 = vpop.f32.mrb[0].mxu0
      %v1057 = vadd.f32 0.0, %v1056
      %v1058 = vpop.f32.mrb[0].mxu0
      %v1059 = vadd.f32 0.0, %v1058
      %v1060 = vpop.f32.mrb[0].mxu0
      %v1061 = vadd.f32 0.0, %v1060
      %1062 = vmatprep.mubr.bf16.mxu0 0
      %1063 = vmatmul.mubr.bf16.gmra.mrb[0].mxu0 %v994
      %v1064 = vpop.f32.mrb[0].mxu0
      %v1065 = vadd.f32 0.0, %v1064
      %v1066 = vpop.f32.mrb[0].mxu0
      %v1067 = vadd.f32 0.0, %v1066
      %v1068 = vpop.f32.mrb[0].mxu0
      %v1069 = vadd.f32 0.0, %v1068
      %v1070 = vpop.f32.mrb[0].mxu0
      %v1071 = vadd.f32 0.0, %v1070
      %1072 = vmatprep.mubr.bf16.mxu0 0
      %1073 = vmatmul.mubr.bf16.gmra.mrb[0].mxu0 %v997
      %v1074 = vpop.f32.mrb[0].mxu0
      %v1075 = vadd.f32 0.0, %v1074
      %v1076 = vpop.f32.mrb[0].mxu0
      %v1077 = vadd.f32 0.0, %v1076
      %v1078 = vpop.f32.mrb[0].mxu0
      %v1079 = vadd.f32 0.0, %v1078
      %v1080 = vpop.f32.mrb[0].mxu0
      %v1081 = vadd.f32 0.0, %v1080
      %1082 = vmatprep.mubr.bf16.mxu0 0
      %1083 = vmatmul.mubr.bf16.gmra.mrb[0].mxu0 %v1000
      %v1084 = vpop.f32.mrb[0].mxu0
      %v1085 = vadd.f32 0.0, %v1084
      %v1086 = vpop.f32.mrb[0].mxu0
      %v1087 = vadd.f32 0.0, %v1086
      %v1088 = vpop.f32.mrb[0].mxu0
      %v1089 = vadd.f32 0.0, %v1088
      %v1090 = vpop.f32.mrb[0].mxu0
      %v1091 = vadd.f32 0.0, %v1090
      %1092 = vmatprep.mubr.bf16.mxu0 0
      %1093 = vmatmul.mubr.bf16.gmra.mrb[0].mxu0 %v1003
      %v1094 = vpop.f32.mrb[0].mxu0
      %v1095 = vadd.f32 0.0, %v1094
      %v1096 = vpop.f32.mrb[0].mxu0
      %v1097 = vadd.f32 0.0, %v1096
      %v1098 = vpop.f32.mrb[0].mxu0
      %v1099 = vadd.f32 0.0, %v1098
      %v1100 = vpop.f32.mrb[0].mxu0
      %v1101 = vadd.f32 0.0, %v1100
      %1102 = vmatprep.mubr.bf16.mxu0 0
      %1103 = vmatmul.mubr.bf16.gmra.mrb[0].mxu0 %v1006
      %v1104 = vpop.f32.mrb[0].mxu0
      %v1105 = vadd.f32 0.0, %v1104
      %v1106 = vpop.f32.mrb[0].mxu0
      %v1107 = vadd.f32 0.0, %v1106
      %v1108 = vpop.f32.mrb[0].mxu0
      %v1109 = vadd.f32 0.0, %v1108
      %v1110 = vpop.f32.mrb[0].mxu0
      %v1111 = vadd.f32 0.0, %v1110
      %1112 = vmatprep.mubr.bf16.mxu0 0
      %1113 = vmatmul.mubr.bf16.gmra.mrb[0].mxu0 %v1009
      %v1114 = vpop.f32.mrb[0].mxu0
      %v1115 = vadd.f32 0.0, %v1114
      %v1116 = vpop.f32.mrb[0].mxu0
      %v1117 = vadd.f32 0.0, %v1116
      %v1118 = vpop.f32.mrb[0].mxu0
      %v1119 = vadd.f32 0.0, %v1118
      %v1120 = vpop.f32.mrb[0].mxu0
      %v1121 = vadd.f32 0.0, %v1120
      %1122 = vmatprep.mubr.bf16.mxu0 0
      %1123 = vmatmul.mubr.bf16.gmra.mrb[0].mxu0 %v1012
      %v1124 = vpop.f32.mrb[0].mxu0
      %v1125 = vadd.f32 0.0, %v1124
      %v1126 = vpop.f32.mrb[0].mxu0
      %v1127 = vadd.f32 0.0, %v1126
      %v1128 = vpop.f32.mrb[0].mxu0
      %v1129 = vadd.f32 0.0, %v1128
      %v1130 = vpop.f32.mrb[0].mxu0
      %v1131 = vadd.f32 0.0, %v1130
      %1132 = vdwg.mxu0
      %v1133 = vadd.f32 %v887, %v1055
      %v1134 = vadd.f32 %v888, %v1057
      %v1135 = vadd.f32 %v889, %v1059
      %v1136 = vadd.f32 %v890, %v1061
      %v1137 = vadd.f32 %v891, %v1065
      %v1138 = vadd.f32 %v892, %v1067
      %v1139 = vadd.f32 %v893, %v1069
      %v1140 = vadd.f32 %v894, %v1071
      %v1141 = vadd.f32 %v895, %v1075
      %v1142 = vadd.f32 %v896, %v1077
      %v1143 = vadd.f32 %v897, %v1079
      %v1144 = vadd.f32 %v898, %v1081
      %v1145 = vadd.f32 %v899, %v1085
      %v1146 = vadd.f32 %v900, %v1087
      %v1147 = vadd.f32 %v901, %v1089
      %v1148 = vadd.f32 %v902, %v1091
      %v1149 = vadd.f32 %v903, %v1095
      %v1150 = vadd.f32 %v904, %v1097
      %v1151 = vadd.f32 %v905, %v1099
      %v1152 = vadd.f32 %v906, %v1101
      %v1153 = vadd.f32 %v907, %v1105
      %v1154 = vadd.f32 %v908, %v1107
      %v1155 = vadd.f32 %v909, %v1109
      %v1156 = vadd.f32 %v910, %v1111
      %v1157 = vadd.f32 %v911, %v1115
      %v1158 = vadd.f32 %v912, %v1117
      %v1159 = vadd.f32 %v913, %v1119
      %v1160 = vadd.f32 %v914, %v1121
      %v1161 = vadd.f32 %v915, %v1125
      %v1162 = vadd.f32 %v916, %v1127
      %v1163 = vadd.f32 %v917, %v1129
      %v1164 = vadd.f32 %v918, %v1131
      %v1165 = vld [vmem:[%s214] sm:$0xff]
      %v1167 = vcombine.high %v1165, %v1165
      %v1169 = vpack.c.bf16 %v1165, %v1165
      %v1170 = vpack.c.bf16 %v1167, %v1167
      %s1171 = scalar_lea.vmem %s1, 256
      %v1172 = vld [vmem:[%s1171] sm:$0xf]
      %v1173 = vld [vmem:[%s1171 + $0x4] sm:$0xf]
      %v1174 = vld [vmem:[%s1171 + $0x8] sm:$0xf]
      %v1175 = vld [vmem:[%s1171 + $0xc] sm:$0xf]
      %v1176 = vld [vmem:[%s1171 + $0x10] sm:$0xf]
      %v1177 = vld [vmem:[%s1171 + $0x14] sm:$0xf]
      %v1178 = vld [vmem:[%s1171 + $0x18] sm:$0xf]
      %v1179 = vld [vmem:[%s1171 + $0x1c] sm:$0xf]
      %v1180 = vld [vmem:[%s1171 + $0x20] sm:$0xf]
      %v1181 = vld [vmem:[%s1171 + $0x24] sm:$0xf]
      %v1182 = vld [vmem:[%s1171 + $0x28] sm:$0xf]
      %v1183 = vld [vmem:[%s1171 + $0x2c] sm:$0xf]
      %v1184 = vld [vmem:[%s1171 + $0x30] sm:$0xf]
      %v1185 = vld [vmem:[%s1171 + $0x34] sm:$0xf]
      %v1186 = vld [vmem:[%s1171 + $0x38] sm:$0xf]
      %v1187 = vld [vmem:[%s1171 + $0x3c] sm:$0xf]
      %v1204 = vunpack.c.l.b16 %v1172
      %v1205 = vunpack.c.l.b16 %v1173
      %v1206 = vunpack.c.l.b16 %v1174
      %v1207 = vunpack.c.l.b16 %v1175
      %v1208 = vunpack.c.l.b16 %v1176
      %v1209 = vunpack.c.l.b16 %v1177
      %v1210 = vunpack.c.l.b16 %v1178
      %v1211 = vunpack.c.l.b16 %v1179
      %v1212 = vunpack.c.l.b16 %v1180
      %v1213 = vunpack.c.l.b16 %v1181
      %v1214 = vunpack.c.l.b16 %v1182
      %v1215 = vunpack.c.l.b16 %v1183
      %v1216 = vunpack.c.l.b16 %v1184
      %v1217 = vunpack.c.l.b16 %v1185
      %v1218 = vunpack.c.l.b16 %v1186
      %v1219 = vunpack.c.l.b16 %v1187
      %v1220 = vpack.c.b16 %v1205, %v1204
      %v1221 = vpack.c.b16 %v1207, %v1206
      %v1222 = vpack.c.b16 %v1209, %v1208
      %v1223 = vpack.c.b16 %v1211, %v1210
      %v1224 = vpack.c.b16 %v1213, %v1212
      %v1225 = vpack.c.b16 %v1215, %v1214
      %v1226 = vpack.c.b16 %v1217, %v1216
      %v1227 = vpack.c.b16 %v1219, %v1218
      %1230 = vrot.lane.b32.xlu0 %v1169, 111
      %v1231 = vpop.permute.xlu0 %1230
      %1232 = vrot.lane.b32.xlu0 %v1170, 111
      %v1233 = vpop.permute.xlu0 %1232
      %vm1234 = vcmask 908288
      %v1235 = vsel %vm1234, %v1231, %v1233
      %v1237 = vsel %vm345, %v1220, 0
      %v1240 = vsel %vm345, %v1221, 0
      %v1243 = vsel %vm345, %v1222, 0
      %v1246 = vsel %vm345, %v1223, 0
      %v1249 = vsel %vm345, %v1224, 0
      %v1252 = vsel %vm345, %v1225, 0
      %v1255 = vsel %vm345, %v1226, 0
      %v1258 = vsel %vm345, %v1227, 0
      %v1261 = vsel %vm370, %v1235, 0
      %v1264 = vsel %vm370, %v1233, 0
      %1266 = vmatprep.subr.bf16.mxu0 %v1264
      %1267 = vmatpush1.bf16.msra.mxu0 %v1261
      %1268 = vmatprep.subr.bf16.mxu0 0
      %1269 = vmatpush1.bf16.msra.mxu0 0
      %1270 = vmatprep.subr.bf16.mxu0 0
      %1271 = vmatpush1.bf16.msra.mxu0 0
      %1272 = vmatprep.subr.bf16.mxu0 0
      %1273 = vmatpush1.bf16.msra.mxu0 0
      %1274 = vmatprep.subr.bf16.mxu0 0
      %1275 = vmatpush1.bf16.msra.mxu0 0
      %1276 = vmatprep.subr.bf16.mxu0 0
      %1277 = vmatpush1.bf16.msra.mxu0 0
      %1278 = vmatprep.subr.bf16.mxu0 0
      %1279 = vmatpush1.bf16.msra.mxu0 0
      %1280 = vmatprep.subr.bf16.mxu0 0
      %1281 = vmatpush1.bf16.msra.mxu0 0
      %1282 = vmatprep.subr.bf16.mxu0 0
      %1283 = vmatpush1.bf16.msra.mxu0 0
      %1284 = vmatprep.subr.bf16.mxu0 0
      %1285 = vmatpush1.bf16.msra.mxu0 0
      %1286 = vmatprep.subr.bf16.mxu0 0
      %1287 = vmatpush1.bf16.msra.mxu0 0
      %1288 = vmatprep.subr.bf16.mxu0 0
      %1289 = vmatpush1.bf16.msra.mxu0 0
      %1290 = vmatprep.subr.bf16.mxu0 0
      %1291 = vmatpush1.bf16.msra.mxu0 0
      %1292 = vmatprep.subr.bf16.mxu0 0
      %1293 = vmatpush1.bf16.msra.mxu0 0
      %1294 = vmatprep.subr.bf16.mxu0 0
      %1295 = vmatpush1.bf16.msra.mxu0 0
      %1296 = vmatprep.subr.bf16.mxu0 0
      %1297 = vmatpush1.bf16.msra.mxu0 0
      %1298 = vmatprep.mubr.bf16.mxu0 0
      %1299 = vmatmul.mubr.bf16.gmra.mrb[0].mxu0 %v1237
      %v1300 = vpop.f32.mrb[0].mxu0
      %v1301 = vadd.f32 0.0, %v1300
      %v1302 = vpop.f32.mrb[0].mxu0
      %v1303 = vadd.f32 0.0, %v1302
      %v1304 = vpop.f32.mrb[0].mxu0
      %v1305 = vadd.f32 0.0, %v1304
      %v1306 = vpop.f32.mrb[0].mxu0
      %v1307 = vadd.f32 0.0, %v1306
      %1308 = vmatprep.mubr.bf16.mxu0 0
      %1309 = vmatmul.mubr.bf16.gmra.mrb[0].mxu0 %v1240
      %v1310 = vpop.f32.mrb[0].mxu0
      %v1311 = vadd.f32 0.0, %v1310
      %v1312 = vpop.f32.mrb[0].mxu0
      %v1313 = vadd.f32 0.0, %v1312
      %v1314 = vpop.f32.mrb[0].mxu0
      %v1315 = vadd.f32 0.0, %v1314
      %v1316 = vpop.f32.mrb[0].mxu0
      %v1317 = vadd.f32 0.0, %v1316
      %1318 = vmatprep.mubr.bf16.mxu0 0
      %1319 = vmatmul.mubr.bf16.gmra.mrb[0].mxu0 %v1243
      %v1320 = vpop.f32.mrb[0].mxu0
      %v1321 = vadd.f32 0.0, %v1320
      %v1322 = vpop.f32.mrb[0].mxu0
      %v1323 = vadd.f32 0.0, %v1322
      %v1324 = vpop.f32.mrb[0].mxu0
      %v1325 = vadd.f32 0.0, %v1324
      %v1326 = vpop.f32.mrb[0].mxu0
      %v1327 = vadd.f32 0.0, %v1326
      %1328 = vmatprep.mubr.bf16.mxu0 0
      %1329 = vmatmul.mubr.bf16.gmra.mrb[0].mxu0 %v1246
      %v1330 = vpop.f32.mrb[0].mxu0
      %v1331 = vadd.f32 0.0, %v1330
      %v1332 = vpop.f32.mrb[0].mxu0
      %v1333 = vadd.f32 0.0, %v1332
      %v1334 = vpop.f32.mrb[0].mxu0
      %v1335 = vadd.f32 0.0, %v1334
      %v1336 = vpop.f32.mrb[0].mxu0
      %v1337 = vadd.f32 0.0, %v1336
      %1338 = vmatprep.mubr.bf16.mxu0 0
      %1339 = vmatmul.mubr.bf16.gmra.mrb[0].mxu0 %v1249
      %v1340 = vpop.f32.mrb[0].mxu0
      %v1341 = vadd.f32 0.0, %v1340
      %v1342 = vpop.f32.mrb[0].mxu0
      %v1343 = vadd.f32 0.0, %v1342
      %v1344 = vpop.f32.mrb[0].mxu0
      %v1345 = vadd.f32 0.0, %v1344
      %v1346 = vpop.f32.mrb[0].mxu0
      %v1347 = vadd.f32 0.0, %v1346
      %1348 = vmatprep.mubr.bf16.mxu0 0
      %1349 = vmatmul.mubr.bf16.gmra.mrb[0].mxu0 %v1252
      %v1350 = vpop.f32.mrb[0].mxu0
      %v1351 = vadd.f32 0.0, %v1350
      %v1352 = vpop.f32.mrb[0].mxu0
      %v1353 = vadd.f32 0.0, %v1352
      %v1354 = vpop.f32.mrb[0].mxu0
      %v1355 = vadd.f32 0.0, %v1354
      %v1356 = vpop.f32.mrb[0].mxu0
      %v1357 = vadd.f32 0.0, %v1356
      %1358 = vmatprep.mubr.bf16.mxu0 0
      %1359 = vmatmul.mubr.bf16.gmra.mrb[0].mxu0 %v1255
      %v1360 = vpop.f32.mrb[0].mxu0
      %v1361 = vadd.f32 0.0, %v1360
      %v1362 = vpop.f32.mrb[0].mxu0
      %v1363 = vadd.f32 0.0, %v1362
      %v1364 = vpop.f32.mrb[0].mxu0
      %v1365 = vadd.f32 0.0, %v1364
      %v1366 = vpop.f32.mrb[0].mxu0
      %v1367 = vadd.f32 0.0, %v1366
      %1368 = vmatprep.mubr.bf16.mxu0 0
      %1369 = vmatmul.mubr.bf16.gmra.mrb[0].mxu0 %v1258
      %v1370 = vpop.f32.mrb[0].mxu0
      %v1371 = vadd.f32 0.0, %v1370
      %v1372 = vpop.f32.mrb[0].mxu0
      %v1373 = vadd.f32 0.0, %v1372
      %v1374 = vpop.f32.mrb[0].mxu0
      %v1375 = vadd.f32 0.0, %v1374
      %v1376 = vpop.f32.mrb[0].mxu0
      %v1377 = vadd.f32 0.0, %v1376
      %1378 = vdwg.mxu0
      %v1379 = vadd.f32 %v1133, %v1301
      %v1380 = vadd.f32 %v1134, %v1303
      %v1381 = vadd.f32 %v1135, %v1305
      %v1382 = vadd.f32 %v1136, %v1307
      %v1383 = vadd.f32 %v1137, %v1311
      %v1384 = vadd.f32 %v1138, %v1313
      %v1385 = vadd.f32 %v1139, %v1315
      %v1386 = vadd.f32 %v1140, %v1317
      %v1387 = vadd.f32 %v1141, %v1321
      %v1388 = vadd.f32 %v1142, %v1323
      %v1389 = vadd.f32 %v1143, %v1325
      %v1390 = vadd.f32 %v1144, %v1327
      %v1391 = vadd.f32 %v1145, %v1331
      %v1392 = vadd.f32 %v1146, %v1333
      %v1393 = vadd.f32 %v1147, %v1335
      %v1394 = vadd.f32 %v1148, %v1337
      %v1395 = vadd.f32 %v1149, %v1341
      %v1396 = vadd.f32 %v1150, %v1343
      %v1397 = vadd.f32 %v1151, %v1345
      %v1398 = vadd.f32 %v1152, %v1347
      %v1399 = vadd.f32 %v1153, %v1351
      %v1400 = vadd.f32 %v1154, %v1353
      %v1401 = vadd.f32 %v1155, %v1355
      %v1402 = vadd.f32 %v1156, %v1357
      %v1403 = vadd.f32 %v1157, %v1361
      %v1404 = vadd.f32 %v1158, %v1363
      %v1405 = vadd.f32 %v1159, %v1365
      %v1406 = vadd.f32 %v1160, %v1367
      %v1407 = vadd.f32 %v1161, %v1371
      %v1408 = vadd.f32 %v1162, %v1373
      %v1409 = vadd.f32 %v1163, %v1375
      %v1410 = vadd.f32 %v1164, %v1377
      %v1411 = vld [vmem:[%s214] sm:$0xff]
      %v1413 = vcombine.high %v1411, %v1411
      %v1415 = vpack.c.bf16 %v1411, %v1411
      %v1416 = vpack.c.bf16 %v1413, %v1413
      %s1417 = scalar_lea.vmem %s1, 320
      %v1418 = vld [vmem:[%s1417] sm:$0xf]
      %v1419 = vld [vmem:[%s1417 + $0x4] sm:$0xf]
      %v1420 = vld [vmem:[%s1417 + $0x8] sm:$0xf]
      %v1421 = vld [vmem:[%s1417 + $0xc] sm:$0xf]
      %v1422 = vld [vmem:[%s1417 + $0x10] sm:$0xf]
      %v1423 = vld [vmem:[%s1417 + $0x14] sm:$0xf]
      %v1424 = vld [vmem:[%s1417 + $0x18] sm:$0xf]
      %v1425 = vld [vmem:[%s1417 + $0x1c] sm:$0xf]
      %v1426 = vld [vmem:[%s1417 + $0x20] sm:$0xf]
      %v1427 = vld [vmem:[%s1417 + $0x24] sm:$0xf]
      %v1428 = vld [vmem:[%s1417 + $0x28] sm:$0xf]
      %v1429 = vld [vmem:[%s1417 + $0x2c] sm:$0xf]
      %v1430 = vld [vmem:[%s1417 + $0x30] sm:$0xf]
      %v1431 = vld [vmem:[%s1417 + $0x34] sm:$0xf]
      %v1432 = vld [vmem:[%s1417 + $0x38] sm:$0xf]
      %v1433 = vld [vmem:[%s1417 + $0x3c] sm:$0xf]
      %v1450 = vunpack.c.l.b16 %v1418
      %v1451 = vunpack.c.l.b16 %v1419
      %v1452 = vunpack.c.l.b16 %v1420
      %v1453 = vunpack.c.l.b16 %v1421
      %v1454 = vunpack.c.l.b16 %v1422
      %v1455 = vunpack.c.l.b16 %v1423
      %v1456 = vunpack.c.l.b16 %v1424
      %v1457 = vunpack.c.l.b16 %v1425
      %v1458 = vunpack.c.l.b16 %v1426
      %v1459 = vunpack.c.l.b16 %v1427
      %v1460 = vunpack.c.l.b16 %v1428
      %v1461 = vunpack.c.l.b16 %v1429
      %v1462 = vunpack.c.l.b16 %v1430
      %v1463 = vunpack.c.l.b16 %v1431
      %v1464 = vunpack.c.l.b16 %v1432
      %v1465 = vunpack.c.l.b16 %v1433
      %v1466 = vpack.c.b16 %v1451, %v1450
      %v1467 = vpack.c.b16 %v1453, %v1452
      %v1468 = vpack.c.b16 %v1455, %v1454
      %v1469 = vpack.c.b16 %v1457, %v1456
      %v1470 = vpack.c.b16 %v1459, %v1458
      %v1471 = vpack.c.b16 %v1461, %v1460
      %v1472 = vpack.c.b16 %v1463, %v1462
      %v1473 = vpack.c.b16 %v1465, %v1464
      %1476 = vrot.lane.b32.xlu0 %v1415, 110
      %v1477 = vpop.permute.xlu0 %1476
      %1478 = vrot.lane.b32.xlu0 %v1416, 110
      %v1479 = vpop.permute.xlu0 %1478
      %vm1480 = vcmask 900096
      %v1481 = vsel %vm1480, %v1477, %v1479
      %v1483 = vsel %vm345, %v1466, 0
      %v1486 = vsel %vm345, %v1467, 0
      %v1489 = vsel %vm345, %v1468, 0
      %v1492 = vsel %vm345, %v1469, 0
      %v1495 = vsel %vm345, %v1470, 0
      %v1498 = vsel %vm345, %v1471, 0
      %v1501 = vsel %vm345, %v1472, 0
      %v1504 = vsel %vm345, %v1473, 0
      %v1507 = vsel %vm370, %v1481, 0
      %v1510 = vsel %vm370, %v1479, 0
      %1512 = vmatprep.subr.bf16.mxu0 %v1510
      %1513 = vmatpush1.bf16.msra.mxu0 %v1507
      %1514 = vmatprep.subr.bf16.mxu0 0
      %1515 = vmatpush1.bf16.msra.mxu0 0
      %1516 = vmatprep.subr.bf16.mxu0 0
      %1517 = vmatpush1.bf16.msra.mxu0 0
      %1518 = vmatprep.subr.bf16.mxu0 0
      %1519 = vmatpush1.bf16.msra.mxu0 0
      %1520 = vmatprep.subr.bf16.mxu0 0
      %1521 = vmatpush1.bf16.msra.mxu0 0
      %1522 = vmatprep.subr.bf16.mxu0 0
      %1523 = vmatpush1.bf16.msra.mxu0 0
      %1524 = vmatprep.subr.bf16.mxu0 0
      %1525 = vmatpush1.bf16.msra.mxu0 0
      %1526 = vmatprep.subr.bf16.mxu0 0
      %1527 = vmatpush1.bf16.msra.mxu0 0
      %1528 = vmatprep.subr.bf16.mxu0 0
      %1529 = vmatpush1.bf16.msra.mxu0 0
      %1530 = vmatprep.subr.bf16.mxu0 0
      %1531 = vmatpush1.bf16.msra.mxu0 0
      %1532 = vmatprep.subr.bf16.mxu0 0
      %1533 = vmatpush1.bf16.msra.mxu0 0
      %1534 = vmatprep.subr.bf16.mxu0 0
      %1535 = vmatpush1.bf16.msra.mxu0 0
      %1536 = vmatprep.subr.bf16.mxu0 0
      %1537 = vmatpush1.bf16.msra.mxu0 0
      %1538 = vmatprep.subr.bf16.mxu0 0
      %1539 = vmatpush1.bf16.msra.mxu0 0
      %1540 = vmatprep.subr.bf16.mxu0 0
      %1541 = vmatpush1.bf16.msra.mxu0 0
      %1542 = vmatprep.subr.bf16.mxu0 0
      %1543 = vmatpush1.bf16.msra.mxu0 0
      %1544 = vmatprep.mubr.bf16.mxu0 0
      %1545 = vmatmul.mubr.bf16.gmra.mrb[0].mxu0 %v1483
      %v1546 = vpop.f32.mrb[0].mxu0
      %v1547 = vadd.f32 0.0, %v1546
      %v1548 = vpop.f32.mrb[0].mxu0
      %v1549 = vadd.f32 0.0, %v1548
      %v1550 = vpop.f32.mrb[0].mxu0
      %v1551 = vadd.f32 0.0, %v1550
      %v1552 = vpop.f32.mrb[0].mxu0
      %v1553 = vadd.f32 0.0, %v1552
      %1554 = vmatprep.mubr.bf16.mxu0 0
      %1555 = vmatmul.mubr.bf16.gmra.mrb[0].mxu0 %v1486
      %v1556 = vpop.f32.mrb[0].mxu0
      %v1557 = vadd.f32 0.0, %v1556
      %v1558 = vpop.f32.mrb[0].mxu0
      %v1559 = vadd.f32 0.0, %v1558
      %v1560 = vpop.f32.mrb[0].mxu0
      %v1561 = vadd.f32 0.0, %v1560
      %v1562 = vpop.f32.mrb[0].mxu0
      %v1563 = vadd.f32 0.0, %v1562
      %1564 = vmatprep.mubr.bf16.mxu0 0
      %1565 = vmatmul.mubr.bf16.gmra.mrb[0].mxu0 %v1489
      %v1566 = vpop.f32.mrb[0].mxu0
      %v1567 = vadd.f32 0.0, %v1566
      %v1568 = vpop.f32.mrb[0].mxu0
      %v1569 = vadd.f32 0.0, %v1568
      %v1570 = vpop.f32.mrb[0].mxu0
      %v1571 = vadd.f32 0.0, %v1570
      %v1572 = vpop.f32.mrb[0].mxu0
      %v1573 = vadd.f32 0.0, %v1572
      %1574 = vmatprep.mubr.bf16.mxu0 0
      %1575 = vmatmul.mubr.bf16.gmra.mrb[0].mxu0 %v1492
      %v1576 = vpop.f32.mrb[0].mxu0
      %v1577 = vadd.f32 0.0, %v1576
      %v1578 = vpop.f32.mrb[0].mxu0
      %v1579 = vadd.f32 0.0, %v1578
      %v1580 = vpop.f32.mrb[0].mxu0
      %v1581 = vadd.f32 0.0, %v1580
      %v1582 = vpop.f32.mrb[0].mxu0
      %v1583 = vadd.f32 0.0, %v1582
      %1584 = vmatprep.mubr.bf16.mxu0 0
      %1585 = vmatmul.mubr.bf16.gmra.mrb[0].mxu0 %v1495
      %v1586 = vpop.f32.mrb[0].mxu0
      %v1587 = vadd.f32 0.0, %v1586
      %v1588 = vpop.f32.mrb[0].mxu0
      %v1589 = vadd.f32 0.0, %v1588
      %v1590 = vpop.f32.mrb[0].mxu0
      %v1591 = vadd.f32 0.0, %v1590
      %v1592 = vpop.f32.mrb[0].mxu0
      %v1593 = vadd.f32 0.0, %v1592
      %1594 = vmatprep.mubr.bf16.mxu0 0
      %1595 = vmatmul.mubr.bf16.gmra.mrb[0].mxu0 %v1498
      %v1596 = vpop.f32.mrb[0].mxu0
      %v1597 = vadd.f32 0.0, %v1596
      %v1598 = vpop.f32.mrb[0].mxu0
      %v1599 = vadd.f32 0.0, %v1598
      %v1600 = vpop.f32.mrb[0].mxu0
      %v1601 = vadd.f32 0.0, %v1600
      %v1602 = vpop.f32.mrb[0].mxu0
      %v1603 = vadd.f32 0.0, %v1602
      %1604 = vmatprep.mubr.bf16.mxu0 0
      %1605 = vmatmul.mubr.bf16.gmra.mrb[0].mxu0 %v1501
      %v1606 = vpop.f32.mrb[0].mxu0
      %v1607 = vadd.f32 0.0, %v1606
      %v1608 = vpop.f32.mrb[0].mxu0
      %v1609 = vadd.f32 0.0, %v1608
      %v1610 = vpop.f32.mrb[0].mxu0
      %v1611 = vadd.f32 0.0, %v1610
      %v1612 = vpop.f32.mrb[0].mxu0
      %v1613 = vadd.f32 0.0, %v1612
      %1614 = vmatprep.mubr.bf16.mxu0 0
      %1615 = vmatmul.mubr.bf16.gmra.mrb[0].mxu0 %v1504
      %v1616 = vpop.f32.mrb[0].mxu0
      %v1617 = vadd.f32 0.0, %v1616
      %v1618 = vpop.f32.mrb[0].mxu0
      %v1619 = vadd.f32 0.0, %v1618
      %v1620 = vpop.f32.mrb[0].mxu0
      %v1621 = vadd.f32 0.0, %v1620
      %v1622 = vpop.f32.mrb[0].mxu0
      %v1623 = vadd.f32 0.0, %v1622
      %1624 = vdwg.mxu0
      %v1625 = vadd.f32 %v1379, %v1547
      %v1626 = vadd.f32 %v1380, %v1549
      %v1627 = vadd.f32 %v1381, %v1551
      %v1628 = vadd.f32 %v1382, %v1553
      %v1629 = vadd.f32 %v1383, %v1557
      %v1630 = vadd.f32 %v1384, %v1559
      %v1631 = vadd.f32 %v1385, %v1561
      %v1632 = vadd.f32 %v1386, %v1563
      %v1633 = vadd.f32 %v1387, %v1567
      %v1634 = vadd.f32 %v1388, %v1569
      %v1635 = vadd.f32 %v1389, %v1571
      %v1636 = vadd.f32 %v1390, %v1573
      %v1637 = vadd.f32 %v1391, %v1577
      %v1638 = vadd.f32 %v1392, %v1579
      %v1639 = vadd.f32 %v1393, %v1581
      %v1640 = vadd.f32 %v1394, %v1583
      %v1641 = vadd.f32 %v1395, %v1587
      %v1642 = vadd.f32 %v1396, %v1589
      %v1643 = vadd.f32 %v1397, %v1591
      %v1644 = vadd.f32 %v1398, %v1593
      %v1645 = vadd.f32 %v1399, %v1597
      %v1646 = vadd.f32 %v1400, %v1599
      %v1647 = vadd.f32 %v1401, %v1601
      %v1648 = vadd.f32 %v1402, %v1603
      %v1649 = vadd.f32 %v1403, %v1607
      %v1650 = vadd.f32 %v1404, %v1609
      %v1651 = vadd.f32 %v1405, %v1611
      %v1652 = vadd.f32 %v1406, %v1613
      %v1653 = vadd.f32 %v1407, %v1617
      %v1654 = vadd.f32 %v1408, %v1619
      %v1655 = vadd.f32 %v1409, %v1621
      %v1656 = vadd.f32 %v1410, %v1623
      %v1657 = vld [vmem:[%s214] sm:$0xff]
      %v1659 = vcombine.high %v1657, %v1657
      %v1661 = vpack.c.bf16 %v1657, %v1657
      %v1662 = vpack.c.bf16 %v1659, %v1659
      %s1663 = scalar_lea.vmem %s1, 384
      %v1664 = vld [vmem:[%s1663] sm:$0xf]
      %v1665 = vld [vmem:[%s1663 + $0x4] sm:$0xf]
      %v1666 = vld [vmem:[%s1663 + $0x8] sm:$0xf]
      %v1667 = vld [vmem:[%s1663 + $0xc] sm:$0xf]
      %v1668 = vld [vmem:[%s1663 + $0x10] sm:$0xf]
      %v1669 = vld [vmem:[%s1663 + $0x14] sm:$0xf]
      %v1670 = vld [vmem:[%s1663 + $0x18] sm:$0xf]
      %v1671 = vld [vmem:[%s1663 + $0x1c] sm:$0xf]
      %v1672 = vld [vmem:[%s1663 + $0x20] sm:$0xf]
      %v1673 = vld [vmem:[%s1663 + $0x24] sm:$0xf]
      %v1674 = vld [vmem:[%s1663 + $0x28] sm:$0xf]
      %v1675 = vld [vmem:[%s1663 + $0x2c] sm:$0xf]
      %v1676 = vld [vmem:[%s1663 + $0x30] sm:$0xf]
      %v1677 = vld [vmem:[%s1663 + $0x34] sm:$0xf]
      %v1678 = vld [vmem:[%s1663 + $0x38] sm:$0xf]
      %v1679 = vld [vmem:[%s1663 + $0x3c] sm:$0xf]
      %v1696 = vunpack.c.l.b16 %v1664
      %v1697 = vunpack.c.l.b16 %v1665
      %v1698 = vunpack.c.l.b16 %v1666
      %v1699 = vunpack.c.l.b16 %v1667
      %v1700 = vunpack.c.l.b16 %v1668
      %v1701 = vunpack.c.l.b16 %v1669
      %v1702 = vunpack.c.l.b16 %v1670
      %v1703 = vunpack.c.l.b16 %v1671
      %v1704 = vunpack.c.l.b16 %v1672
      %v1705 = vunpack.c.l.b16 %v1673
      %v1706 = vunpack.c.l.b16 %v1674
      %v1707 = vunpack.c.l.b16 %v1675
      %v1708 = vunpack.c.l.b16 %v1676
      %v1709 = vunpack.c.l.b16 %v1677
      %v1710 = vunpack.c.l.b16 %v1678
      %v1711 = vunpack.c.l.b16 %v1679
      %v1712 = vpack.c.b16 %v1697, %v1696
      %v1713 = vpack.c.b16 %v1699, %v1698
      %v1714 = vpack.c.b16 %v1701, %v1700
      %v1715 = vpack.c.b16 %v1703, %v1702
      %v1716 = vpack.c.b16 %v1705, %v1704
      %v1717 = vpack.c.b16 %v1707, %v1706
      %v1718 = vpack.c.b16 %v1709, %v1708
      %v1719 = vpack.c.b16 %v1711, %v1710
      %1722 = vrot.lane.b32.xlu0 %v1661, 96
      %v1723 = vpop.permute.xlu0 %1722
      %1724 = vrot.lane.b32.xlu0 %v1662, 96
      %v1725 = vpop.permute.xlu0 %1724
      %vm1726 = vcmask 785408
      %v1727 = vsel %vm1726, %v1723, %v1725
      %v1729 = vsel %vm345, %v1712, 0
      %v1732 = vsel %vm345, %v1713, 0
      %v1735 = vsel %vm345, %v1714, 0
      %v1738 = vsel %vm345, %v1715, 0
      %v1741 = vsel %vm345, %v1716, 0
      %v1744 = vsel %vm345, %v1717, 0
      %v1747 = vsel %vm345, %v1718, 0
      %v1750 = vsel %vm345, %v1719, 0
      %v1753 = vsel %vm370, %v1727, 0
      %v1756 = vsel %vm370, %v1725, 0
      %1758 = vmatprep.subr.bf16.mxu0 %v1756
      %1759 = vmatpush1.bf16.msra.mxu0 %v1753
      %1760 = vmatprep.subr.bf16.mxu0 0
      %1761 = vmatpush1.bf16.msra.mxu0 0
      %1762 = vmatprep.subr.bf16.mxu0 0
      %1763 = vmatpush1.bf16.msra.mxu0 0
      %1764 = vmatprep.subr.bf16.mxu0 0
      %1765 = vmatpush1.bf16.msra.mxu0 0
      %1766 = vmatprep.subr.bf16.mxu0 0
      %1767 = vmatpush1.bf16.msra.mxu0 0
      %1768 = vmatprep.subr.bf16.mxu0 0
      %1769 = vmatpush1.bf16.msra.mxu0 0
      %1770 = vmatprep.subr.bf16.mxu0 0
      %1771 = vmatpush1.bf16.msra.mxu0 0
      %1772 = vmatprep.subr.bf16.mxu0 0
      %1773 = vmatpush1.bf16.msra.mxu0 0
      %1774 = vmatprep.subr.bf16.mxu0 0
      %1775 = vmatpush1.bf16.msra.mxu0 0
      %1776 = vmatprep.subr.bf16.mxu0 0
      %1777 = vmatpush1.bf16.msra.mxu0 0
      %1778 = vmatprep.subr.bf16.mxu0 0
      %1779 = vmatpush1.bf16.msra.mxu0 0
      %1780 = vmatprep.subr.bf16.mxu0 0
      %1781 = vmatpush1.bf16.msra.mxu0 0
      %1782 = vmatprep.subr.bf16.mxu0 0
      %1783 = vmatpush1.bf16.msra.mxu0 0
      %1784 = vmatprep.subr.bf16.mxu0 0
      %1785 = vmatpush1.bf16.msra.mxu0 0
      %1786 = vmatprep.subr.bf16.mxu0 0
      %1787 = vmatpush1.bf16.msra.mxu0 0
      %1788 = vmatprep.subr.bf16.mxu0 0
      %1789 = vmatpush1.bf16.msra.mxu0 0
      %1790 = vmatprep.mubr.bf16.mxu0 0
      %1791 = vmatmul.mubr.bf16.gmra.mrb[0].mxu0 %v1729
      %v1792 = vpop.f32.mrb[0].mxu0
      %v1793 = vadd.f32 0.0, %v1792
      %v1794 = vpop.f32.mrb[0].mxu0
      %v1795 = vadd.f32 0.0, %v1794
      %v1796 = vpop.f32.mrb[0].mxu0
      %v1797 = vadd.f32 0.0, %v1796
      %v1798 = vpop.f32.mrb[0].mxu0
      %v1799 = vadd.f32 0.0, %v1798
      %1800 = vmatprep.mubr.bf16.mxu0 0
      %1801 = vmatmul.mubr.bf16.gmra.mrb[0].mxu0 %v1732
      %v1802 = vpop.f32.mrb[0].mxu0
      %v1803 = vadd.f32 0.0, %v1802
      %v1804 = vpop.f32.mrb[0].mxu0
      %v1805 = vadd.f32 0.0, %v1804
      %v1806 = vpop.f32.mrb[0].mxu0
      %v1807 = vadd.f32 0.0, %v1806
      %v1808 = vpop.f32.mrb[0].mxu0
      %v1809 = vadd.f32 0.0, %v1808
      %1810 = vmatprep.mubr.bf16.mxu0 0
      %1811 = vmatmul.mubr.bf16.gmra.mrb[0].mxu0 %v1735
      %v1812 = vpop.f32.mrb[0].mxu0
      %v1813 = vadd.f32 0.0, %v1812
      %v1814 = vpop.f32.mrb[0].mxu0
      %v1815 = vadd.f32 0.0, %v1814
      %v1816 = vpop.f32.mrb[0].mxu0
      %v1817 = vadd.f32 0.0, %v1816
      %v1818 = vpop.f32.mrb[0].mxu0
      %v1819 = vadd.f32 0.0, %v1818
      %1820 = vmatprep.mubr.bf16.mxu0 0
      %1821 = vmatmul.mubr.bf16.gmra.mrb[0].mxu0 %v1738
      %v1822 = vpop.f32.mrb[0].mxu0
      %v1823 = vadd.f32 0.0, %v1822
      %v1824 = vpop.f32.mrb[0].mxu0
      %v1825 = vadd.f32 0.0, %v1824
      %v1826 = vpop.f32.mrb[0].mxu0
      %v1827 = vadd.f32 0.0, %v1826
      %v1828 = vpop.f32.mrb[0].mxu0
      %v1829 = vadd.f32 0.0, %v1828
      %1830 = vmatprep.mubr.bf16.mxu0 0
      %1831 = vmatmul.mubr.bf16.gmra.mrb[0].mxu0 %v1741
      %v1832 = vpop.f32.mrb[0].mxu0
      %v1833 = vadd.f32 0.0, %v1832
      %v1834 = vpop.f32.mrb[0].mxu0
      %v1835 = vadd.f32 0.0, %v1834
      %v1836 = vpop.f32.mrb[0].mxu0
      %v1837 = vadd.f32 0.0, %v1836
      %v1838 = vpop.f32.mrb[0].mxu0
      %v1839 = vadd.f32 0.0, %v1838
      %1840 = vmatprep.mubr.bf16.mxu0 0
      %1841 = vmatmul.mubr.bf16.gmra.mrb[0].mxu0 %v1744
      %v1842 = vpop.f32.mrb[0].mxu0
      %v1843 = vadd.f32 0.0, %v1842
      %v1844 = vpop.f32.mrb[0].mxu0
      %v1845 = vadd.f32 0.0, %v1844
      %v1846 = vpop.f32.mrb[0].mxu0
      %v1847 = vadd.f32 0.0, %v1846
      %v1848 = vpop.f32.mrb[0].mxu0
      %v1849 = vadd.f32 0.0, %v1848
      %1850 = vmatprep.mubr.bf16.mxu0 0
      %1851 = vmatmul.mubr.bf16.gmra.mrb[0].mxu0 %v1747
      %v1852 = vpop.f32.mrb[0].mxu0
      %v1853 = vadd.f32 0.0, %v1852
      %v1854 = vpop.f32.mrb[0].mxu0
      %v1855 = vadd.f32 0.0, %v1854
      %v1856 = vpop.f32.mrb[0].mxu0
      %v1857 = vadd.f32 0.0, %v1856
      %v1858 = vpop.f32.mrb[0].mxu0
      %v1859 = vadd.f32 0.0, %v1858
      %1860 = vmatprep.mubr.bf16.mxu0 0
      %1861 = vmatmul.mubr.bf16.gmra.mrb[0].mxu0 %v1750
      %v1862 = vpop.f32.mrb[0].mxu0
      %v1863 = vadd.f32 0.0, %v1862
      %v1864 = vpop.f32.mrb[0].mxu0
      %v1865 = vadd.f32 0.0, %v1864
      %v1866 = vpop.f32.mrb[0].mxu0
      %v1867 = vadd.f32 0.0, %v1866
      %v1868 = vpop.f32.mrb[0].mxu0
      %v1869 = vadd.f32 0.0, %v1868
      %1870 = vdwg.mxu0
      %v1871 = vadd.f32 %v1625, %v1793
      %v1872 = vadd.f32 %v1626, %v1795
      %v1873 = vadd.f32 %v1627, %v1797
      %v1874 = vadd.f32 %v1628, %v1799
      %v1875 = vadd.f32 %v1629, %v1803
      %v1876 = vadd.f32 %v1630, %v1805
      %v1877 = vadd.f32 %v1631, %v1807
      %v1878 = vadd.f32 %v1632, %v1809
      %v1879 = vadd.f32 %v1633, %v1813
      %v1880 = vadd.f32 %v1634, %v1815
      %v1881 = vadd.f32 %v1635, %v1817
      %v1882 = vadd.f32 %v1636, %v1819
      %v1883 = vadd.f32 %v1637, %v1823
      %v1884 = vadd.f32 %v1638, %v1825
      %v1885 = vadd.f32 %v1639, %v1827
      %v1886 = vadd.f32 %v1640, %v1829
      %v1887 = vadd.f32 %v1641, %v1833
      %v1888 = vadd.f32 %v1642, %v1835
      %v1889 = vadd.f32 %v1643, %v1837
      %v1890 = vadd.f32 %v1644, %v1839
      %v1891 = vadd.f32 %v1645, %v1843
      %v1892 = vadd.f32 %v1646, %v1845
      %v1893 = vadd.f32 %v1647, %v1847
      %v1894 = vadd.f32 %v1648, %v1849
      %v1895 = vadd.f32 %v1649, %v1853
      %v1896 = vadd.f32 %v1650, %v1855
      %v1897 = vadd.f32 %v1651, %v1857
      %v1898 = vadd.f32 %v1652, %v1859
      %v1899 = vadd.f32 %v1653, %v1863
      %v1900 = vadd.f32 %v1654, %v1865
      %v1901 = vadd.f32 %v1655, %v1867
      %v1902 = vadd.f32 %v1656, %v1869
      %v1903 = vld [vmem:[%s214] sm:$0xff]
      %v1905 = vcombine.high %v1903, %v1903
      %v1907 = vpack.c.bf16 %v1903, %v1903
      %v1908 = vpack.c.bf16 %v1905, %v1905
      %s1909 = scalar_lea.vmem %s1, 448
      %v1910 = vld [vmem:[%s1909] sm:$0xf]
      %v1911 = vld [vmem:[%s1909 + $0x4] sm:$0xf]
      %v1912 = vld [vmem:[%s1909 + $0x8] sm:$0xf]
      %v1913 = vld [vmem:[%s1909 + $0xc] sm:$0xf]
      %v1914 = vld [vmem:[%s1909 + $0x10] sm:$0xf]
      %v1915 = vld [vmem:[%s1909 + $0x14] sm:$0xf]
      %v1916 = vld [vmem:[%s1909 + $0x18] sm:$0xf]
      %v1917 = vld [vmem:[%s1909 + $0x1c] sm:$0xf]
      %v1918 = vld [vmem:[%s1909 + $0x20] sm:$0xf]
      %v1919 = vld [vmem:[%s1909 + $0x24] sm:$0xf]
      %v1920 = vld [vmem:[%s1909 + $0x28] sm:$0xf]
      %v1921 = vld [vmem:[%s1909 + $0x2c] sm:$0xf]
      %v1922 = vld [vmem:[%s1909 + $0x30] sm:$0xf]
      %v1923 = vld [vmem:[%s1909 + $0x34] sm:$0xf]
      %v1924 = vld [vmem:[%s1909 + $0x38] sm:$0xf]
      %v1925 = vld [vmem:[%s1909 + $0x3c] sm:$0xf]
      %v1942 = vunpack.c.l.b16 %v1910
      %v1943 = vunpack.c.l.b16 %v1911
      %v1944 = vunpack.c.l.b16 %v1912
      %v1945 = vunpack.c.l.b16 %v1913
      %v1946 = vunpack.c.l.b16 %v1914
      %v1947 = vunpack.c.l.b16 %v1915
      %v1948 = vunpack.c.l.b16 %v1916
      %v1949 = vunpack.c.l.b16 %v1917
      %v1950 = vunpack.c.l.b16 %v1918
      %v1951 = vunpack.c.l.b16 %v1919
      %v1952 = vunpack.c.l.b16 %v1920
      %v1953 = vunpack.c.l.b16 %v1921
      %v1954 = vunpack.c.l.b16 %v1922
      %v1955 = vunpack.c.l.b16 %v1923
      %v1956 = vunpack.c.l.b16 %v1924
      %v1957 = vunpack.c.l.b16 %v1925
      %v1958 = vpack.c.b16 %v1943, %v1942
      %v1959 = vpack.c.b16 %v1945, %v1944
      %v1960 = vpack.c.b16 %v1947, %v1946
      %v1961 = vpack.c.b16 %v1949, %v1948
      %v1962 = vpack.c.b16 %v1951, %v1950
      %v1963 = vpack.c.b16 %v1953, %v1952
      %v1964 = vpack.c.b16 %v1955, %v1954
      %v1965 = vpack.c.b16 %v1957, %v1956
      %1968 = vrot.lane.b32.xlu0 %v1907, 95
      %v1969 = vpop.permute.xlu0 %1968
      %1970 = vrot.lane.b32.xlu0 %v1908, 95
      %v1971 = vpop.permute.xlu0 %1970
      %vm1972 = vcmask 777216
      %v1973 = vsel %vm1972, %v1969, %v1971
      %v1975 = vsel %vm345, %v1958, 0
      %v1978 = vsel %vm345, %v1959, 0
      %v1981 = vsel %vm345, %v1960, 0
      %v1984 = vsel %vm345, %v1961, 0
      %v1987 = vsel %vm345, %v1962, 0
      %v1990 = vsel %vm345, %v1963, 0
      %v1993 = vsel %vm345, %v1964, 0
      %v1996 = vsel %vm345, %v1965, 0
      %v1999 = vsel %vm370, %v1973, 0
      %v2002 = vsel %vm370, %v1971, 0
      %2004 = vmatprep.subr.bf16.mxu0 %v2002
      %2005 = vmatpush1.bf16.msra.mxu0 %v1999
      %2006 = vmatprep.subr.bf16.mxu0 0
      %2007 = vmatpush1.bf16.msra.mxu0 0
      %2008 = vmatprep.subr.bf16.mxu0 0
      %2009 = vmatpush1.bf16.msra.mxu0 0
      %2010 = vmatprep.subr.bf16.mxu0 0
      %2011 = vmatpush1.bf16.msra.mxu0 0
      %2012 = vmatprep.subr.bf16.mxu0 0
      %2013 = vmatpush1.bf16.msra.mxu0 0
      %2014 = vmatprep.subr.bf16.mxu0 0
      %2015 = vmatpush1.bf16.msra.mxu0 0
      %2016 = vmatprep.subr.bf16.mxu0 0
      %2017 = vmatpush1.bf16.msra.mxu0 0
      %2018 = vmatprep.subr.bf16.mxu0 0
      %2019 = vmatpush1.bf16.msra.mxu0 0
      %2020 = vmatprep.subr.bf16.mxu0 0
      %2021 = vmatpush1.bf16.msra.mxu0 0
      %2022 = vmatprep.subr.bf16.mxu0 0
      %2023 = vmatpush1.bf16.msra.mxu0 0
      %2024 = vmatprep.subr.bf16.mxu0 0
      %2025 = vmatpush1.bf16.msra.mxu0 0
      %2026 = vmatprep.subr.bf16.mxu0 0
      %2027 = vmatpush1.bf16.msra.mxu0 0
      %2028 = vmatprep.subr.bf16.mxu0 0
      %2029 = vmatpush1.bf16.msra.mxu0 0
      %2030 = vmatprep.subr.bf16.mxu0 0
      %2031 = vmatpush1.bf16.msra.mxu0 0
      %2032 = vmatprep.subr.bf16.mxu0 0
      %2033 = vmatpush1.bf16.msra.mxu0 0
      %2034 = vmatprep.subr.bf16.mxu0 0
      %2035 = vmatpush1.bf16.msra.mxu0 0
      %2036 = vmatprep.mubr.bf16.mxu0 0
      %2037 = vmatmul.mubr.bf16.gmra.mrb[0].mxu0 %v1975
      %v2038 = vpop.f32.mrb[0].mxu0
      %v2039 = vadd.f32 0.0, %v2038
      %v2040 = vpop.f32.mrb[0].mxu0
      %v2041 = vadd.f32 0.0, %v2040
      %v2042 = vpop.f32.mrb[0].mxu0
      %v2043 = vadd.f32 0.0, %v2042
      %v2044 = vpop.f32.mrb[0].mxu0
      %v2045 = vadd.f32 0.0, %v2044
      %2046 = vmatprep.mubr.bf16.mxu0 0
      %2047 = vmatmul.mubr.bf16.gmra.mrb[0].mxu0 %v1978
      %v2048 = vpop.f32.mrb[0].mxu0
      %v2049 = vadd.f32 0.0, %v2048
      %v2050 = vpop.f32.mrb[0].mxu0
      %v2051 = vadd.f32 0.0, %v2050
      %v2052 = vpop.f32.mrb[0].mxu0
      %v2053 = vadd.f32 0.0, %v2052
      %v2054 = vpop.f32.mrb[0].mxu0
      %v2055 = vadd.f32 0.0, %v2054
      %2056 = vmatprep.mubr.bf16.mxu0 0
      %2057 = vmatmul.mubr.bf16.gmra.mrb[0].mxu0 %v1981
      %v2058 = vpop.f32.mrb[0].mxu0
      %v2059 = vadd.f32 0.0, %v2058
      %v2060 = vpop.f32.mrb[0].mxu0
      %v2061 = vadd.f32 0.0, %v2060
      %v2062 = vpop.f32.mrb[0].mxu0
      %v2063 = vadd.f32 0.0, %v2062
      %v2064 = vpop.f32.mrb[0].mxu0
      %v2065 = vadd.f32 0.0, %v2064
      %2066 = vmatprep.mubr.bf16.mxu0 0
      %2067 = vmatmul.mubr.bf16.gmra.mrb[0].mxu0 %v1984
      %v2068 = vpop.f32.mrb[0].mxu0
      %v2069 = vadd.f32 0.0, %v2068
      %v2070 = vpop.f32.mrb[0].mxu0
      %v2071 = vadd.f32 0.0, %v2070
      %v2072 = vpop.f32.mrb[0].mxu0
      %v2073 = vadd.f32 0.0, %v2072
      %v2074 = vpop.f32.mrb[0].mxu0
      %v2075 = vadd.f32 0.0, %v2074
      %2076 = vmatprep.mubr.bf16.mxu0 0
      %2077 = vmatmul.mubr.bf16.gmra.mrb[0].mxu0 %v1987
      %v2078 = vpop.f32.mrb[0].mxu0
      %v2079 = vadd.f32 0.0, %v2078
      %v2080 = vpop.f32.mrb[0].mxu0
      %v2081 = vadd.f32 0.0, %v2080
      %v2082 = vpop.f32.mrb[0].mxu0
      %v2083 = vadd.f32 0.0, %v2082
      %v2084 = vpop.f32.mrb[0].mxu0
      %v2085 = vadd.f32 0.0, %v2084
      %2086 = vmatprep.mubr.bf16.mxu0 0
      %2087 = vmatmul.mubr.bf16.gmra.mrb[0].mxu0 %v1990
      %v2088 = vpop.f32.mrb[0].mxu0
      %v2089 = vadd.f32 0.0, %v2088
      %v2090 = vpop.f32.mrb[0].mxu0
      %v2091 = vadd.f32 0.0, %v2090
      %v2092 = vpop.f32.mrb[0].mxu0
      %v2093 = vadd.f32 0.0, %v2092
      %v2094 = vpop.f32.mrb[0].mxu0
      %v2095 = vadd.f32 0.0, %v2094
      %2096 = vmatprep.mubr.bf16.mxu0 0
      %2097 = vmatmul.mubr.bf16.gmra.mrb[0].mxu0 %v1993
      %v2098 = vpop.f32.mrb[0].mxu0
      %v2099 = vadd.f32 0.0, %v2098
      %v2100 = vpop.f32.mrb[0].mxu0
      %v2101 = vadd.f32 0.0, %v2100
      %v2102 = vpop.f32.mrb[0].mxu0
      %v2103 = vadd.f32 0.0, %v2102
      %v2104 = vpop.f32.mrb[0].mxu0
      %v2105 = vadd.f32 0.0, %v2104
      %2106 = vmatprep.mubr.bf16.mxu0 0
      %2107 = vmatmul.mubr.bf16.gmra.mrb[0].mxu0 %v1996
      %v2108 = vpop.f32.mrb[0].mxu0
      %v2109 = vadd.f32 0.0, %v2108
      %v2110 = vpop.f32.mrb[0].mxu0
      %v2111 = vadd.f32 0.0, %v2110
      %v2112 = vpop.f32.mrb[0].mxu0
      %v2113 = vadd.f32 0.0, %v2112
      %v2114 = vpop.f32.mrb[0].mxu0
      %v2115 = vadd.f32 0.0, %v2114
      %2116 = vdwg.mxu0
      %v2117 = vadd.f32 %v1871, %v2039
      %v2118 = vadd.f32 %v1872, %v2041
      %v2119 = vadd.f32 %v1873, %v2043
      %v2120 = vadd.f32 %v1874, %v2045
      %v2121 = vadd.f32 %v1875, %v2049
      %v2122 = vadd.f32 %v1876, %v2051
      %v2123 = vadd.f32 %v1877, %v2053
      %v2124 = vadd.f32 %v1878, %v2055
      %v2125 = vadd.f32 %v1879, %v2059
      %v2126 = vadd.f32 %v1880, %v2061
      %v2127 = vadd.f32 %v1881, %v2063
      %v2128 = vadd.f32 %v1882, %v2065
      %v2129 = vadd.f32 %v1883, %v2069
      %v2130 = vadd.f32 %v1884, %v2071
      %v2131 = vadd.f32 %v1885, %v2073
      %v2132 = vadd.f32 %v1886, %v2075
      %v2133 = vadd.f32 %v1887, %v2079
      %v2134 = vadd.f32 %v1888, %v2081
      %v2135 = vadd.f32 %v1889, %v2083
      %v2136 = vadd.f32 %v1890, %v2085
      %v2137 = vadd.f32 %v1891, %v2089
      %v2138 = vadd.f32 %v1892, %v2091
      %v2139 = vadd.f32 %v1893, %v2093
      %v2140 = vadd.f32 %v1894, %v2095
      %v2141 = vadd.f32 %v1895, %v2099
      %v2142 = vadd.f32 %v1896, %v2101
      %v2143 = vadd.f32 %v1897, %v2103
      %v2144 = vadd.f32 %v1898, %v2105
      %v2145 = vadd.f32 %v1899, %v2109
      %v2146 = vadd.f32 %v1900, %v2111
      %v2147 = vadd.f32 %v1901, %v2113
      %v2148 = vadd.f32 %v1902, %v2115
      %v2149 = vld [vmem:[%s214] sm:$0xff]
      %v2151 = vcombine.high %v2149, %v2149
      %v2153 = vpack.c.bf16 %v2149, %v2149
      %v2154 = vpack.c.bf16 %v2151, %v2151
      %s2155 = scalar_lea.vmem %s1, 512
      %v2156 = vld [vmem:[%s2155] sm:$0xf]
      %v2157 = vld [vmem:[%s2155 + $0x4] sm:$0xf]
      %v2158 = vld [vmem:[%s2155 + $0x8] sm:$0xf]
      %v2159 = vld [vmem:[%s2155 + $0xc] sm:$0xf]
      %v2160 = vld [vmem:[%s2155 + $0x10] sm:$0xf]
      %v2161 = vld [vmem:[%s2155 + $0x14] sm:$0xf]
      %v2162 = vld [vmem:[%s2155 + $0x18] sm:$0xf]
      %v2163 = vld [vmem:[%s2155 + $0x1c] sm:$0xf]
      %v2164 = vld [vmem:[%s2155 + $0x20] sm:$0xf]
      %v2165 = vld [vmem:[%s2155 + $0x24] sm:$0xf]
      %v2166 = vld [vmem:[%s2155 + $0x28] sm:$0xf]
      %v2167 = vld [vmem:[%s2155 + $0x2c] sm:$0xf]
      %v2168 = vld [vmem:[%s2155 + $0x30] sm:$0xf]
      %v2169 = vld [vmem:[%s2155 + $0x34] sm:$0xf]
      %v2170 = vld [vmem:[%s2155 + $0x38] sm:$0xf]
      %v2171 = vld [vmem:[%s2155 + $0x3c] sm:$0xf]
      %v2188 = vunpack.c.l.b16 %v2156
      %v2189 = vunpack.c.l.b16 %v2157
      %v2190 = vunpack.c.l.b16 %v2158
      %v2191 = vunpack.c.l.b16 %v2159
      %v2192 = vunpack.c.l.b16 %v2160
      %v2193 = vunpack.c.l.b16 %v2161
      %v2194 = vunpack.c.l.b16 %v2162
      %v2195 = vunpack.c.l.b16 %v2163
      %v2196 = vunpack.c.l.b16 %v2164
      %v2197 = vunpack.c.l.b16 %v2165
      %v2198 = vunpack.c.l.b16 %v2166
      %v2199 = vunpack.c.l.b16 %v2167
      %v2200 = vunpack.c.l.b16 %v2168
      %v2201 = vunpack.c.l.b16 %v2169
      %v2202 = vunpack.c.l.b16 %v2170
      %v2203 = vunpack.c.l.b16 %v2171
      %v2204 = vpack.c.b16 %v2189, %v2188
      %v2205 = vpack.c.b16 %v2191, %v2190
      %v2206 = vpack.c.b16 %v2193, %v2192
      %v2207 = vpack.c.b16 %v2195, %v2194
      %v2208 = vpack.c.b16 %v2197, %v2196
      %v2209 = vpack.c.b16 %v2199, %v2198
      %v2210 = vpack.c.b16 %v2201, %v2200
      %v2211 = vpack.c.b16 %v2203, %v2202
      %2214 = vrot.lane.b32.xlu0 %v2153, 94
      %v2215 = vpop.permute.xlu0 %2214
      %2216 = vrot.lane.b32.xlu0 %v2154, 94
      %v2217 = vpop.permute.xlu0 %2216
      %vm2218 = vcmask 769024
      %v2219 = vsel %vm2218, %v2215, %v2217
      %v2221 = vsel %vm345, %v2204, 0
      %v2224 = vsel %vm345, %v2205, 0
      %v2227 = vsel %vm345, %v2206, 0
      %v2230 = vsel %vm345, %v2207, 0
      %v2233 = vsel %vm345, %v2208, 0
      %v2236 = vsel %vm345, %v2209, 0
      %v2239 = vsel %vm345, %v2210, 0
      %v2242 = vsel %vm345, %v2211, 0
      %v2245 = vsel %vm370, %v2219, 0
      %v2248 = vsel %vm370, %v2217, 0
      %2250 = vmatprep.subr.bf16.mxu0 %v2248
      %2251 = vmatpush1.bf16.msra.mxu0 %v2245
      %2252 = vmatprep.subr.bf16.mxu0 0
      %2253 = vmatpush1.bf16.msra.mxu0 0
      %2254 = vmatprep.subr.bf16.mxu0 0
      %2255 = vmatpush1.bf16.msra.mxu0 0
      %2256 = vmatprep.subr.bf16.mxu0 0
      %2257 = vmatpush1.bf16.msra.mxu0 0
      %2258 = vmatprep.subr.bf16.mxu0 0
      %2259 = vmatpush1.bf16.msra.mxu0 0
      %2260 = vmatprep.subr.bf16.mxu0 0
      %2261 = vmatpush1.bf16.msra.mxu0 0
      %2262 = vmatprep.subr.bf16.mxu0 0
      %2263 = vmatpush1.bf16.msra.mxu0 0
      %2264 = vmatprep.subr.bf16.mxu0 0
      %2265 = vmatpush1.bf16.msra.mxu0 0
      %2266 = vmatprep.subr.bf16.mxu0 0
      %2267 = vmatpush1.bf16.msra.mxu0 0
      %2268 = vmatprep.subr.bf16.mxu0 0
      %2269 = vmatpush1.bf16.msra.mxu0 0
      %2270 = vmatprep.subr.bf16.mxu0 0
      %2271 = vmatpush1.bf16.msra.mxu0 0
      %2272 = vmatprep.subr.bf16.mxu0 0
      %2273 = vmatpush1.bf16.msra.mxu0 0
      %2274 = vmatprep.subr.bf16.mxu0 0
      %2275 = vmatpush1.bf16.msra.mxu0 0
      %2276 = vmatprep.subr.bf16.mxu0 0
      %2277 = vmatpush1.bf16.msra.mxu0 0
      %2278 = vmatprep.subr.bf16.mxu0 0
      %2279 = vmatpush1.bf16.msra.mxu0 0
      %2280 = vmatprep.subr.bf16.mxu0 0
      %2281 = vmatpush1.bf16.msra.mxu0 0
      %2282 = vmatprep.mubr.bf16.mxu0 0
      %2283 = vmatmul.mubr.bf16.gmra.mrb[0].mxu0 %v2221
      %v2284 = vpop.f32.mrb[0].mxu0
      %v2285 = vadd.f32 0.0, %v2284
      %v2286 = vpop.f32.mrb[0].mxu0
      %v2287 = vadd.f32 0.0, %v2286
      %v2288 = vpop.f32.mrb[0].mxu0
      %v2289 = vadd.f32 0.0, %v2288
      %v2290 = vpop.f32.mrb[0].mxu0
      %v2291 = vadd.f32 0.0, %v2290
      %2292 = vmatprep.mubr.bf16.mxu0 0
      %2293 = vmatmul.mubr.bf16.gmra.mrb[0].mxu0 %v2224
      %v2294 = vpop.f32.mrb[0].mxu0
      %v2295 = vadd.f32 0.0, %v2294
      %v2296 = vpop.f32.mrb[0].mxu0
      %v2297 = vadd.f32 0.0, %v2296
      %v2298 = vpop.f32.mrb[0].mxu0
      %v2299 = vadd.f32 0.0, %v2298
      %v2300 = vpop.f32.mrb[0].mxu0
      %v2301 = vadd.f32 0.0, %v2300
      %2302 = vmatprep.mubr.bf16.mxu0 0
      %2303 = vmatmul.mubr.bf16.gmra.mrb[0].mxu0 %v2227
      %v2304 = vpop.f32.mrb[0].mxu0
      %v2305 = vadd.f32 0.0, %v2304
      %v2306 = vpop.f32.mrb[0].mxu0
      %v2307 = vadd.f32 0.0, %v2306
      %v2308 = vpop.f32.mrb[0].mxu0
      %v2309 = vadd.f32 0.0, %v2308
      %v2310 = vpop.f32.mrb[0].mxu0
      %v2311 = vadd.f32 0.0, %v2310
      %2312 = vmatprep.mubr.bf16.mxu0 0
      %2313 = vmatmul.mubr.bf16.gmra.mrb[0].mxu0 %v2230
      %v2314 = vpop.f32.mrb[0].mxu0
      %v2315 = vadd.f32 0.0, %v2314
      %v2316 = vpop.f32.mrb[0].mxu0
      %v2317 = vadd.f32 0.0, %v2316
      %v2318 = vpop.f32.mrb[0].mxu0
      %v2319 = vadd.f32 0.0, %v2318
      %v2320 = vpop.f32.mrb[0].mxu0
      %v2321 = vadd.f32 0.0, %v2320
      %2322 = vmatprep.mubr.bf16.mxu0 0
      %2323 = vmatmul.mubr.bf16.gmra.mrb[0].mxu0 %v2233
      %v2324 = vpop.f32.mrb[0].mxu0
      %v2325 = vadd.f32 0.0, %v2324
      %v2326 = vpop.f32.mrb[0].mxu0
      %v2327 = vadd.f32 0.0, %v2326
      %v2328 = vpop.f32.mrb[0].mxu0
      %v2329 = vadd.f32 0.0, %v2328
      %v2330 = vpop.f32.mrb[0].mxu0
      %v2331 = vadd.f32 0.0, %v2330
      %2332 = vmatprep.mubr.bf16.mxu0 0
      %2333 = vmatmul.mubr.bf16.gmra.mrb[0].mxu0 %v2236
      %v2334 = vpop.f32.mrb[0].mxu0
      %v2335 = vadd.f32 0.0, %v2334
      %v2336 = vpop.f32.mrb[0].mxu0
      %v2337 = vadd.f32 0.0, %v2336
      %v2338 = vpop.f32.mrb[0].mxu0
      %v2339 = vadd.f32 0.0, %v2338
      %v2340 = vpop.f32.mrb[0].mxu0
      %v2341 = vadd.f32 0.0, %v2340
      %2342 = vmatprep.mubr.bf16.mxu0 0
      %2343 = vmatmul.mubr.bf16.gmra.mrb[0].mxu0 %v2239
      %v2344 = vpop.f32.mrb[0].mxu0
      %v2345 = vadd.f32 0.0, %v2344
      %v2346 = vpop.f32.mrb[0].mxu0
      %v2347 = vadd.f32 0.0, %v2346
      %v2348 = vpop.f32.mrb[0].mxu0
      %v2349 = vadd.f32 0.0, %v2348
      %v2350 = vpop.f32.mrb[0].mxu0
      %v2351 = vadd.f32 0.0, %v2350
      %2352 = vmatprep.mubr.bf16.mxu0 0
      %2353 = vmatmul.mubr.bf16.gmra.mrb[0].mxu0 %v2242
      %v2354 = vpop.f32.mrb[0].mxu0
      %v2355 = vadd.f32 0.0, %v2354
      %v2356 = vpop.f32.mrb[0].mxu0
      %v2357 = vadd.f32 0.0, %v2356
      %v2358 = vpop.f32.mrb[0].mxu0
      %v2359 = vadd.f32 0.0, %v2358
      %v2360 = vpop.f32.mrb[0].mxu0
      %v2361 = vadd.f32 0.0, %v2360
      %2362 = vdwg.mxu0
      %v2363 = vadd.f32 %v2117, %v2285
      %v2364 = vadd.f32 %v2118, %v2287
      %v2365 = vadd.f32 %v2119, %v2289
      %v2366 = vadd.f32 %v2120, %v2291
      %v2367 = vadd.f32 %v2121, %v2295
      %v2368 = vadd.f32 %v2122, %v2297
      %v2369 = vadd.f32 %v2123, %v2299
      %v2370 = vadd.f32 %v2124, %v2301
      %v2371 = vadd.f32 %v2125, %v2305
      %v2372 = vadd.f32 %v2126, %v2307
      %v2373 = vadd.f32 %v2127, %v2309
      %v2374 = vadd.f32 %v2128, %v2311
      %v2375 = vadd.f32 %v2129, %v2315
      %v2376 = vadd.f32 %v2130, %v2317
      %v2377 = vadd.f32 %v2131, %v2319
      %v2378 = vadd.f32 %v2132, %v2321
      %v2379 = vadd.f32 %v2133, %v2325
      %v2380 = vadd.f32 %v2134, %v2327
      %v2381 = vadd.f32 %v2135, %v2329
      %v2382 = vadd.f32 %v2136, %v2331
      %v2383 = vadd.f32 %v2137, %v2335
      %v2384 = vadd.f32 %v2138, %v2337
      %v2385 = vadd.f32 %v2139, %v2339
      %v2386 = vadd.f32 %v2140, %v2341
      %v2387 = vadd.f32 %v2141, %v2345
      %v2388 = vadd.f32 %v2142, %v2347
      %v2389 = vadd.f32 %v2143, %v2349
      %v2390 = vadd.f32 %v2144, %v2351
      %v2391 = vadd.f32 %v2145, %v2355
      %v2392 = vadd.f32 %v2146, %v2357
      %v2393 = vadd.f32 %v2147, %v2359
      %v2394 = vadd.f32 %v2148, %v2361
      %v2395 = vld [vmem:[%s2] sm:$0x3]
      %v2397 = vlaneseq
      %v2398 = vshrl.u32 %v2397, 7
      %v2399 = vsub.s32 0, %v2398
      %v2400 = vrot.slane %v2395, %v2399
      %v2401 = vlaneseq
      %v2402 = vshrl.u32 %v2401, 7
      %v2403 = vsub.s32 1, %v2402
      %v2404 = vrot.slane %v2395, %v2403
      %v2407 = vmul.f32 %v2363, %v2400
      %v2408 = vmul.f32 %v2364, %v2404
      %v2409 = vmul.f32 %v2365, %v2400
      %v2410 = vmul.f32 %v2366, %v2404
      %v2411 = vmul.f32 %v2367, %v2400
      %v2412 = vmul.f32 %v2368, %v2404
      %v2413 = vmul.f32 %v2369, %v2400
      %v2414 = vmul.f32 %v2370, %v2404
      %v2415 = vmul.f32 %v2371, %v2400
      %v2416 = vmul.f32 %v2372, %v2404
      %v2417 = vmul.f32 %v2373, %v2400
      %v2418 = vmul.f32 %v2374, %v2404
      %v2419 = vmul.f32 %v2375, %v2400
      %v2420 = vmul.f32 %v2376, %v2404
      %v2421 = vmul.f32 %v2377, %v2400
      %v2422 = vmul.f32 %v2378, %v2404
      %v2423 = vmul.f32 %v2379, %v2400
      %v2424 = vmul.f32 %v2380, %v2404
      %v2425 = vmul.f32 %v2381, %v2400
      %v2426 = vmul.f32 %v2382, %v2404
      %v2427 = vmul.f32 %v2383, %v2400
      %v2428 = vmul.f32 %v2384, %v2404
      %v2429 = vmul.f32 %v2385, %v2400
      %v2430 = vmul.f32 %v2386, %v2404
      %v2431 = vmul.f32 %v2387, %v2400
      %v2432 = vmul.f32 %v2388, %v2404
      %v2433 = vmul.f32 %v2389, %v2400
      %v2434 = vmul.f32 %v2390, %v2404
      %v2435 = vmul.f32 %v2391, %v2400
      %v2436 = vmul.f32 %v2392, %v2404
      %v2437 = vmul.f32 %v2393, %v2400
      %v2438 = vmul.f32 %v2394, %v2404
      %v2439 = vpack.c.bf16 %v2409, %v2407
      %v2440 = vpack.c.bf16 %v2410, %v2408
      %v2441 = vpack.c.bf16 %v2413, %v2411
      %v2442 = vpack.c.bf16 %v2414, %v2412
      %v2443 = vpack.c.bf16 %v2417, %v2415
      %v2444 = vpack.c.bf16 %v2418, %v2416
      %v2445 = vpack.c.bf16 %v2421, %v2419
      %v2446 = vpack.c.bf16 %v2422, %v2420
      %v2447 = vpack.c.bf16 %v2425, %v2423
      %v2448 = vpack.c.bf16 %v2426, %v2424
      %v2449 = vpack.c.bf16 %v2429, %v2427
      %v2450 = vpack.c.bf16 %v2430, %v2428
      %v2451 = vpack.c.bf16 %v2433, %v2431
      %v2452 = vpack.c.bf16 %v2434, %v2432
      %v2453 = vpack.c.bf16 %v2437, %v2435
      %v2454 = vpack.c.bf16 %v2438, %v2436
      %v2471 = vunpack.c.l.b16 %v2439
      %v2472 = vunpack.c.l.b16 %v2440
      %v2473 = vunpack.c.h.b16 %v2439
      %v2474 = vunpack.c.h.b16 %v2440
      %v2475 = vunpack.c.l.b16 %v2441
      %v2476 = vunpack.c.l.b16 %v2442
      %v2477 = vunpack.c.h.b16 %v2441
      %v2478 = vunpack.c.h.b16 %v2442
      %v2479 = vunpack.c.l.b16 %v2443
      %v2480 = vunpack.c.l.b16 %v2444
      %v2481 = vunpack.c.h.b16 %v2443
      %v2482 = vunpack.c.h.b16 %v2444
      %v2483 = vunpack.c.l.b16 %v2445
      %v2484 = vunpack.c.l.b16 %v2446
      %v2485 = vunpack.c.h.b16 %v2445
      %v2486 = vunpack.c.h.b16 %v2446
      %v2487 = vunpack.c.l.b16 %v2447
      %v2488 = vunpack.c.l.b16 %v2448
      %v2489 = vunpack.c.h.b16 %v2447
      %v2490 = vunpack.c.h.b16 %v2448
      %v2491 = vunpack.c.l.b16 %v2449
      %v2492 = vunpack.c.l.b16 %v2450
      %v2493 = vunpack.c.h.b16 %v2449
      %v2494 = vunpack.c.h.b16 %v2450
      %v2495 = vunpack.c.l.b16 %v2451
      %v2496 = vunpack.c.l.b16 %v2452
      %v2497 = vunpack.c.h.b16 %v2451
      %v2498 = vunpack.c.h.b16 %v2452
      %v2499 = vunpack.c.l.b16 %v2453
      %v2500 = vunpack.c.l.b16 %v2454
      %v2501 = vunpack.c.h.b16 %v2453
      %v2502 = vunpack.c.h.b16 %v2454
      %v2503 = vpack.c.b16 %v2472, %v2471
      %v2504 = vpack.c.b16 %v2474, %v2473
      %v2505 = vpack.c.b16 %v2476, %v2475
      %v2506 = vpack.c.b16 %v2478, %v2477
      %v2507 = vpack.c.b16 %v2480, %v2479
      %v2508 = vpack.c.b16 %v2482, %v2481
      %v2509 = vpack.c.b16 %v2484, %v2483
      %v2510 = vpack.c.b16 %v2486, %v2485
      %v2511 = vpack.c.b16 %v2488, %v2487
      %v2512 = vpack.c.b16 %v2490, %v2489
      %v2513 = vpack.c.b16 %v2492, %v2491
      %v2514 = vpack.c.b16 %v2494, %v2493
      %v2515 = vpack.c.b16 %v2496, %v2495
      %v2516 = vpack.c.b16 %v2498, %v2497
      %v2517 = vpack.c.b16 %v2500, %v2499
      %v2518 = vpack.c.b16 %v2502, %v2501
      %vm2535 = vcmask 1043456
      %vm2536 = vcmask 769028
      %vm2537 = vmor %vm2536, %vm2535
      %2538 = vst.msk [vmem:[%s219] sm:$0xff] %vm2537, %v2503
      %2539 = vst.msk [vmem:[%s219 + $0x8] sm:$0xff] %vm2537, %v2504
      %2540 = vst.msk [vmem:[%s219 + $0x10] sm:$0xff] %vm2537, %v2505
      %2541 = vst.msk [vmem:[%s219 + $0x18] sm:$0xff] %vm2537, %v2506
      %2542 = vst.msk [vmem:[%s219 + $0x20] sm:$0xff] %vm2537, %v2507
      %2543 = vst.msk [vmem:[%s219 + $0x28] sm:$0xff] %vm2537, %v2508
      %2544 = vst.msk [vmem:[%s219 + $0x30] sm:$0xff] %vm2537, %v2509
      %2545 = vst.msk [vmem:[%s219 + $0x38] sm:$0xff] %vm2537, %v2510
      %2546 = vst.msk [vmem:[%s219 + $0x40] sm:$0xff] %vm2537, %v2511
      %2547 = vst.msk [vmem:[%s219 + $0x48] sm:$0xff] %vm2537, %v2512
      %2548 = vst.msk [vmem:[%s219 + $0x50] sm:$0xff] %vm2537, %v2513
      %2549 = vst.msk [vmem:[%s219 + $0x58] sm:$0xff] %vm2537, %v2514
      %2550 = vst.msk [vmem:[%s219 + $0x60] sm:$0xff] %vm2537, %v2515
      %2551 = vst.msk [vmem:[%s219 + $0x68] sm:$0xff] %vm2537, %v2516
      %2552 = vst.msk [vmem:[%s219 + $0x70] sm:$0xff] %vm2537, %v2517
      %2553 = vst.msk [vmem:[%s219 + $0x78] sm:$0xff] %vm2537, %v2518
      %v2554 = vld [vmem:[%s4] sm:$0xff]
      %v2555 = vld [vmem:[%s4 + $0x8] sm:$0xff]
      %v2556 = vld [vmem:[%s4 + $0x10] sm:$0xff]
      %v2557 = vld [vmem:[%s4 + $0x18] sm:$0xff]
      %v2558 = vld [vmem:[%s4 + $0x20] sm:$0xff]
      %v2559 = vld [vmem:[%s4 + $0x28] sm:$0xff]
      %v2560 = vld [vmem:[%s4 + $0x30] sm:$0xff]
      %v2561 = vld [vmem:[%s4 + $0x38] sm:$0xff]
      %v2562 = vld [vmem:[%s4 + $0x40] sm:$0xff]
      %v2563 = vld [vmem:[%s4 + $0x48] sm:$0xff]
      %v2564 = vld [vmem:[%s4 + $0x50] sm:$0xff]
      %v2565 = vld [vmem:[%s4 + $0x58] sm:$0xff]
      %v2566 = vld [vmem:[%s4 + $0x60] sm:$0xff]
      %v2567 = vld [vmem:[%s4 + $0x68] sm:$0xff]
      %v2568 = vld [vmem:[%s4 + $0x70] sm:$0xff]
      %v2569 = vld [vmem:[%s4 + $0x78] sm:$0xff]
      %vm2570 = vcmask 769024
      %v2571 = vsel %vm2570, %v2408, 0.0
      %v2572 = vadd.f32 %v2407, %v2571
      %2573 = vadd.xlane.f32.xlu0 %v2572
      %v2574 = vpop.xlane.xlu0 %2573
      %v2575 = vsel %vm2570, %v2410, 0.0
      %v2576 = vadd.f32 %v2409, %v2575
      %2577 = vadd.xlane.f32.xlu0 %v2576
      %v2578 = vpop.xlane.xlu0 %2577
      %v2579 = vsel %vm2570, %v2412, 0.0
      %v2580 = vadd.f32 %v2411, %v2579
      %2581 = vadd.xlane.f32.xlu0 %v2580
      %v2582 = vpop.xlane.xlu0 %2581
      %v2583 = vsel %vm2570, %v2414, 0.0
      %v2584 = vadd.f32 %v2413, %v2583
      %2585 = vadd.xlane.f32.xlu0 %v2584
      %v2586 = vpop.xlane.xlu0 %2585
      %v2587 = vsel %vm2570, %v2416, 0.0
      %v2588 = vadd.f32 %v2415, %v2587
      %2589 = vadd.xlane.f32.xlu0 %v2588
      %v2590 = vpop.xlane.xlu0 %2589
      %v2591 = vsel %vm2570, %v2418, 0.0
      %v2592 = vadd.f32 %v2417, %v2591
      %2593 = vadd.xlane.f32.xlu0 %v2592
      %v2594 = vpop.xlane.xlu0 %2593
      %v2595 = vsel %vm2570, %v2420, 0.0
      %v2596 = vadd.f32 %v2419, %v2595
      %2597 = vadd.xlane.f32.xlu0 %v2596
      %v2598 = vpop.xlane.xlu0 %2597
      %v2599 = vsel %vm2570, %v2422, 0.0
      %v2600 = vadd.f32 %v2421, %v2599
      %2601 = vadd.xlane.f32.xlu0 %v2600
      %v2602 = vpop.xlane.xlu0 %2601
      %v2603 = vsel %vm2570, %v2424, 0.0
      %v2604 = vadd.f32 %v2423, %v2603
      %2605 = vadd.xlane.f32.xlu0 %v2604
      %v2606 = vpop.xlane.xlu0 %2605
      %v2607 = vsel %vm2570, %v2426, 0.0
      %v2608 = vadd.f32 %v2425, %v2607
      %2609 = vadd.xlane.f32.xlu0 %v2608
      %v2610 = vpop.xlane.xlu0 %2609
      %v2611 = vsel %vm2570, %v2428, 0.0
      %v2612 = vadd.f32 %v2427, %v2611
      %2613 = vadd.xlane.f32.xlu0 %v2612
      %v2614 = vpop.xlane.xlu0 %2613
      %v2615 = vsel %vm2570, %v2430, 0.0
      %v2616 = vadd.f32 %v2429, %v2615
      %2617 = vadd.xlane.f32.xlu0 %v2616
      %v2618 = vpop.xlane.xlu0 %2617
      %v2619 = vsel %vm2570, %v2432, 0.0
      %v2620 = vadd.f32 %v2431, %v2619
      %2621 = vadd.xlane.f32.xlu0 %v2620
      %v2622 = vpop.xlane.xlu0 %2621
      %v2623 = vsel %vm2570, %v2434, 0.0
      %v2624 = vadd.f32 %v2433, %v2623
      %2625 = vadd.xlane.f32.xlu0 %v2624
      %v2626 = vpop.xlane.xlu0 %2625
      %v2627 = vsel %vm2570, %v2436, 0.0
      %v2628 = vadd.f32 %v2435, %v2627
      %2629 = vadd.xlane.f32.xlu0 %v2628
      %v2630 = vpop.xlane.xlu0 %2629
      %v2631 = vsel %vm2570, %v2438, 0.0
      %v2632 = vadd.f32 %v2437, %v2631
      %2633 = vadd.xlane.f32.xlu0 %v2632
      %v2634 = vpop.xlane.xlu0 %2633
      %v2635 = vadd.f32 %v2554, %v2574
      %v2636 = vadd.f32 %v2555, %v2578
      %v2637 = vadd.f32 %v2556, %v2582
      %v2638 = vadd.f32 %v2557, %v2586
      %v2639 = vadd.f32 %v2558, %v2590
      %v2640 = vadd.f32 %v2559, %v2594
      %v2641 = vadd.f32 %v2560, %v2598
      %v2642 = vadd.f32 %v2561, %v2602
      %v2643 = vadd.f32 %v2562, %v2606
      %v2644 = vadd.f32 %v2563, %v2610
      %v2645 = vadd.f32 %v2564, %v2614
      %v2646 = vadd.f32 %v2565, %v2618
      %v2647 = vadd.f32 %v2566, %v2622
      %v2648 = vadd.f32 %v2567, %v2626
      %v2649 = vadd.f32 %v2568, %v2630
      %v2650 = vadd.f32 %v2569, %v2634
      %vm2651 = vcmask 7168
      %2652 = vst.msk [vmem:[%s4] sm:$0xff] %vm2651, %v2635
      %2653 = vst.msk [vmem:[%s4 + $0x8] sm:$0xff] %vm2651, %v2636
      %2654 = vst.msk [vmem:[%s4 + $0x10] sm:$0xff] %vm2651, %v2637
      %2655 = vst.msk [vmem:[%s4 + $0x18] sm:$0xff] %vm2651, %v2638
      %2656 = vst.msk [vmem:[%s4 + $0x20] sm:$0xff] %vm2651, %v2639
      %2657 = vst.msk [vmem:[%s4 + $0x28] sm:$0xff] %vm2651, %v2640
      %2658 = vst.msk [vmem:[%s4 + $0x30] sm:$0xff] %vm2651, %v2641
      %2659 = vst.msk [vmem:[%s4 + $0x38] sm:$0xff] %vm2651, %v2642
      %2660 = vst.msk [vmem:[%s4 + $0x40] sm:$0xff] %vm2651, %v2643
      %2661 = vst.msk [vmem:[%s4 + $0x48] sm:$0xff] %vm2651, %v2644
      %2662 = vst.msk [vmem:[%s4 + $0x50] sm:$0xff] %vm2651, %v2645
      %2663 = vst.msk [vmem:[%s4 + $0x58] sm:$0xff] %vm2651, %v2646
      %2664 = vst.msk [vmem:[%s4 + $0x60] sm:$0xff] %vm2651, %v2647
      %2665 = vst.msk [vmem:[%s4 + $0x68] sm:$0xff] %vm2651, %v2648
      %2666 = vst.msk [vmem:[%s4 + $0x70] sm:$0xff] %vm2651, %v2649
      %2667 = vst.msk [vmem:[%s4 + $0x78] sm:$0xff] %vm2651, %v2650
      %v2668 = vld [vmem:[%s5] sm:$0xff]
      %v2669 = vld [vmem:[%s5 + $0x8] sm:$0xff]
      %v2670 = vld [vmem:[%s5 + $0x10] sm:$0xff]
      %v2671 = vld [vmem:[%s5 + $0x18] sm:$0xff]
      %v2672 = vld [vmem:[%s5 + $0x20] sm:$0xff]
      %v2673 = vld [vmem:[%s5 + $0x28] sm:$0xff]
      %v2674 = vld [vmem:[%s5 + $0x30] sm:$0xff]
      %v2675 = vld [vmem:[%s5 + $0x38] sm:$0xff]
      %v2676 = vld [vmem:[%s5 + $0x40] sm:$0xff]
      %v2677 = vld [vmem:[%s5 + $0x48] sm:$0xff]
      %v2678 = vld [vmem:[%s5 + $0x50] sm:$0xff]
      %v2679 = vld [vmem:[%s5 + $0x58] sm:$0xff]
      %v2680 = vld [vmem:[%s5 + $0x60] sm:$0xff]
      %v2681 = vld [vmem:[%s5 + $0x68] sm:$0xff]
      %v2682 = vld [vmem:[%s5 + $0x70] sm:$0xff]
      %v2683 = vld [vmem:[%s5 + $0x78] sm:$0xff]
      %v2684 = vmul.f32 %v2407, %v2407
      %v2685 = vmul.f32 %v2408, %v2408
      %v2686 = vmul.f32 %v2409, %v2409
      %v2687 = vmul.f32 %v2410, %v2410
      %v2688 = vmul.f32 %v2411, %v2411
      %v2689 = vmul.f32 %v2412, %v2412
      %v2690 = vmul.f32 %v2413, %v2413
      %v2691 = vmul.f32 %v2414, %v2414
      %v2692 = vmul.f32 %v2415, %v2415
      %v2693 = vmul.f32 %v2416, %v2416
      %v2694 = vmul.f32 %v2417, %v2417
      %v2695 = vmul.f32 %v2418, %v2418
      %v2696 = vmul.f32 %v2419, %v2419
      %v2697 = vmul.f32 %v2420, %v2420
      %v2698 = vmul.f32 %v2421, %v2421
      %v2699 = vmul.f32 %v2422, %v2422
      %v2700 = vmul.f32 %v2423, %v2423
      %v2701 = vmul.f32 %v2424, %v2424
      %v2702 = vmul.f32 %v2425, %v2425
      %v2703 = vmul.f32 %v2426, %v2426
      %v2704 = vmul.f32 %v2427, %v2427
      %v2705 = vmul.f32 %v2428, %v2428
      %v2706 = vmul.f32 %v2429, %v2429
      %v2707 = vmul.f32 %v2430, %v2430
      %v2708 = vmul.f32 %v2431, %v2431
      %v2709 = vmul.f32 %v2432, %v2432
      %v2710 = vmul.f32 %v2433, %v2433
      %v2711 = vmul.f32 %v2434, %v2434
      %v2712 = vmul.f32 %v2435, %v2435
      %v2713 = vmul.f32 %v2436, %v2436
      %v2714 = vmul.f32 %v2437, %v2437
      %v2715 = vmul.f32 %v2438, %v2438
      %v2716 = vsel %vm2570, %v2685, 0.0
      %v2717 = vadd.f32 %v2684, %v2716
      %2718 = vadd.xlane.f32.xlu0 %v2717
      %v2719 = vpop.xlane.xlu0 %2718
      %v2720 = vsel %vm2570, %v2687, 0.0
      %v2721 = vadd.f32 %v2686, %v2720
      %2722 = vadd.xlane.f32.xlu0 %v2721
      %v2723 = vpop.xlane.xlu0 %2722
      %v2724 = vsel %vm2570, %v2689, 0.0
      %v2725 = vadd.f32 %v2688, %v2724
      %2726 = vadd.xlane.f32.xlu0 %v2725
      %v2727 = vpop.xlane.xlu0 %2726
      %v2728 = vsel %vm2570, %v2691, 0.0
      %v2729 = vadd.f32 %v2690, %v2728
      %2730 = vadd.xlane.f32.xlu0 %v2729
      %v2731 = vpop.xlane.xlu0 %2730
      %v2732 = vsel %vm2570, %v2693, 0.0
      %v2733 = vadd.f32 %v2692, %v2732
      %2734 = vadd.xlane.f32.xlu0 %v2733
      %v2735 = vpop.xlane.xlu0 %2734
      %v2736 = vsel %vm2570, %v2695, 0.0
      %v2737 = vadd.f32 %v2694, %v2736
      %2738 = vadd.xlane.f32.xlu0 %v2737
      %v2739 = vpop.xlane.xlu0 %2738
      %v2740 = vsel %vm2570, %v2697, 0.0
      %v2741 = vadd.f32 %v2696, %v2740
      %2742 = vadd.xlane.f32.xlu0 %v2741
      %v2743 = vpop.xlane.xlu0 %2742
      %v2744 = vsel %vm2570, %v2699, 0.0
      %v2745 = vadd.f32 %v2698, %v2744
      %2746 = vadd.xlane.f32.xlu0 %v2745
      %v2747 = vpop.xlane.xlu0 %2746
      %v2748 = vsel %vm2570, %v2701, 0.0
      %v2749 = vadd.f32 %v2700, %v2748
      %2750 = vadd.xlane.f32.xlu0 %v2749
      %v2751 = vpop.xlane.xlu0 %2750
      %v2752 = vsel %vm2570, %v2703, 0.0
      %v2753 = vadd.f32 %v2702, %v2752
      %2754 = vadd.xlane.f32.xlu0 %v2753
      %v2755 = vpop.xlane.xlu0 %2754
      %v2756 = vsel %vm2570, %v2705, 0.0
      %v2757 = vadd.f32 %v2704, %v2756
      %2758 = vadd.xlane.f32.xlu0 %v2757
      %v2759 = vpop.xlane.xlu0 %2758
      %v2760 = vsel %vm2570, %v2707, 0.0
      %v2761 = vadd.f32 %v2706, %v2760
      %2762 = vadd.xlane.f32.xlu0 %v2761
      %v2763 = vpop.xlane.xlu0 %2762
      %v2764 = vsel %vm2570, %v2709, 0.0
      %v2765 = vadd.f32 %v2708, %v2764
      %2766 = vadd.xlane.f32.xlu0 %v2765
      %v2767 = vpop.xlane.xlu0 %2766
      %v2768 = vsel %vm2570, %v2711, 0.0
      %v2769 = vadd.f32 %v2710, %v2768
      %2770 = vadd.xlane.f32.xlu0 %v2769
      %v2771 = vpop.xlane.xlu0 %2770
      %v2772 = vsel %vm2570, %v2713, 0.0
      %v2773 = vadd.f32 %v2712, %v2772
      %2774 = vadd.xlane.f32.xlu0 %v2773
      %v2775 = vpop.xlane.xlu0 %2774
      %v2776 = vsel %vm2570, %v2715, 0.0
      %v2777 = vadd.f32 %v2714, %v2776
      %2778 = vadd.xlane.f32.xlu0 %v2777
      %v2779 = vpop.xlane.xlu0 %2778
      %v2780 = vadd.f32 %v2668, %v2719
      %v2781 = vadd.f32 %v2669, %v2723
      %v2782 = vadd.f32 %v2670, %v2727
      %v2783 = vadd.f32 %v2671, %v2731
      %v2784 = vadd.f32 %v2672, %v2735
      %v2785 = vadd.f32 %v2673, %v2739
      %v2786 = vadd.f32 %v2674, %v2743
      %v2787 = vadd.f32 %v2675, %v2747
      %v2788 = vadd.f32 %v2676, %v2751
      %v2789 = vadd.f32 %v2677, %v2755
      %v2790 = vadd.f32 %v2678, %v2759
      %v2791 = vadd.f32 %v2679, %v2763
      %v2792 = vadd.f32 %v2680, %v2767
      %v2793 = vadd.f32 %v2681, %v2771
      %v2794 = vadd.f32 %v2682, %v2775
      %v2795 = vadd.f32 %v2683, %v2779
      %2796 = vst.msk [vmem:[%s5] sm:$0xff] %vm2651, %v2780
      %2797 = vst.msk [vmem:[%s5 + $0x8] sm:$0xff] %vm2651, %v2781
      %2798 = vst.msk [vmem:[%s5 + $0x10] sm:$0xff] %vm2651, %v2782
      %2799 = vst.msk [vmem:[%s5 + $0x18] sm:$0xff] %vm2651, %v2783
      %2800 = vst.msk [vmem:[%s5 + $0x20] sm:$0xff] %vm2651, %v2784
      %2801 = vst.msk [vmem:[%s5 + $0x28] sm:$0xff] %vm2651, %v2785
      %2802 = vst.msk [vmem:[%s5 + $0x30] sm:$0xff] %vm2651, %v2786
      %2803 = vst.msk [vmem:[%s5 + $0x38] sm:$0xff] %vm2651, %v2787
      %2804 = vst.msk [vmem:[%s5 + $0x40] sm:$0xff] %vm2651, %v2788
      %2805 = vst.msk [vmem:[%s5 + $0x48] sm:$0xff] %vm2651, %v2789
      %2806 = vst.msk [vmem:[%s5 + $0x50] sm:$0xff] %vm2651, %v2790
      %2807 = vst.msk [vmem:[%s5 + $0x58] sm:$0xff] %vm2651, %v2791
      %2808 = vst.msk [vmem:[%s5 + $0x60] sm:$0xff] %vm2651, %v2792
      %2809 = vst.msk [vmem:[%s5 + $0x68] sm:$0xff] %vm2651, %v2793
      %2810 = vst.msk [vmem:[%s5 + $0x70] sm:$0xff] %vm2651, %v2794
      %2811 = vst.msk [vmem:[%s5 + $0x78] sm:$0xff] %vm2651, %v2795
      %p2812 = scmp.lt.s32.totalorder %s17, 1
      %s2813 = scalar_select %p2812, %s17, 1
      %s2814 = smul.addr %s2813, 32
      %s2815 = smul.addr %s2814, 4
      %s2816 = scalar_lea.vmem %s3, %s2815
      // Predicated region
      $region37: #{convolutional_block_forward.1} parent=31 // pred_check
        %p2817 = pneg %p103
      $region38: #{convolutional_block_forward.1} parent=31 // pred_check_branch
        %2819 = sbr.rel (%p2817) target = $region40
      $region39: #{convolutional_block_forward.1} parent=31 // pred_region
        _
      $region40: #{convolutional_block_forward.1} parent=31 // pred_fallthru
        _
      // Predicated region
      $region41: #{convolutional_block_forward.1} parent=31 // pred_check
        %p2820 = pneg %p124
      $region42: #{convolutional_block_forward.1} parent=31 // pred_check_branch
        %2822 = sbr.rel (%p2820) target = $region44
      $region43: #{convolutional_block_forward.1} parent=31 // pred_region
        _
      $region44: #{convolutional_block_forward.1} parent=31 // pred_fallthru
        _
      // Predicated region
      $region45: #{convolutional_block_forward.1} parent=31 // pred_check
        %p2823 = pneg %p145
      $region46: #{convolutional_block_forward.1} parent=31 // pred_check_branch
        %2825 = sbr.rel (%p2823) target = $region48
      $region47: #{convolutional_block_forward.1} parent=31 // pred_region
        _
      $region48: #{convolutional_block_forward.1} parent=31 // pred_fallthru
        _
      // Predicated region
      $region49: #{convolutional_block_forward.1} parent=31 // pred_check
        %p2826 = pneg %p124
      $region50: #{convolutional_block_forward.1} parent=31 // pred_check_branch
        %2828 = sbr.rel (%p2826) target = $region52
      $region51: #{convolutional_block_forward.1} parent=31 // pred_region
        _
      $region52: #{convolutional_block_forward.1} parent=31 // pred_fallthru
        _
      // Predicated region
      $region53: #{convolutional_block_forward.1} parent=31 // pred_check
        %p2829 = pneg %p145
      $region54: #{convolutional_block_forward.1} parent=31 // pred_check_branch
        %2831 = sbr.rel (%p2829) target = $region56
      $region55: #{convolutional_block_forward.1} parent=31 // pred_region
        _
      $region56: #{convolutional_block_forward.1} parent=31 // pred_fallthru
        _
    $region32: #{convolutional_block_forward.1} parent=5 // pred_fallthru
      _
    %p2832 = scmp.le.s32.totalorder 2, %s12
    // Predicated region
    $region57: #{convolutional_block_forward.1} parent=5 // pred_check
      %p2833 = pneg %p2832
    $region58: #{convolutional_block_forward.1} parent=5 // pred_check_branch
      %2835 = sbr.rel (%p2833) target = $region60
    $region59: #{convolutional_block_forward.1} parent=5 // pred_region
      %s2836 = ssub.s32 %s12, 2
      // Predicated region
      $region61: #{convolutional_block_forward.1} parent=59 // pred_check
        %p2837 = pneg %p109
      $region62: #{convolutional_block_forward.1} parent=59 // pred_check_branch
        %2839 = sbr.rel (%p2837) target = $region64
      $region63: #{convolutional_block_forward.1} parent=59 // pred_region
        %p2840 = scmp.lt.s32.totalorder %s18, 1
        %s2841 = scalar_select %p2840, %s18, 1
        %s2842 = smul.addr %s2841, 32
        %s2843 = smul.addr %s2842, 4
        %s2844 = scalar_lea.vmem %s3, %s2843
      $region64: #{convolutional_block_forward.1} parent=59 // pred_fallthru
        _
    $region60: #{convolutional_block_forward.1} parent=5 // pred_fallthru
      _
  $region6: #{convolutional_block_forward.1} parent=0 // loop_footer
    %s16 = sadd.s32 1, %s12
  $region7: #{convolutional_block_forward.1} parent=0 // loop_footer_branch
    %11 = sbr.rel target = $region3
  $region8: #{convolutional_block_forward.1} parent=0 // loop_exit
    _

</llo_original>
